<compile_context>
chip_gen: v7x
topology: tpu7x:2x2x1
jax: 0.10.0
libtpu: 0.0.40
codegen_flags: <defaults>
</compile_context>

<pallas_src>
import jax
import jax.numpy as jnp
from jax.experimental import pallas as pl
from jax.experimental.pallas import tpu as pltpu

PROJ_DIM = 128
IMG_FEAT_DIM = 1280
TXT_FEAT_DIM = 768
HIDDEN_DIM = 256
NUM_CLASSES = 4
OUT_PAD = 128          # lane-dense padded logits width (real logits in [:, :4])
BN_EPS = 1e-5


# ---------------------------------------------------------------------------
# Kernel: one batch tile of the multimodal head.
# ---------------------------------------------------------------------------
def _head_kernel(img_ref, txt_ref, w_ip_ref, w_tp_ref, wc1_ref, wc2_ref,
                 bias_ref, out_ref):
    # bias_ref rows (f32 [6, 256]):
    #   0: b_ip (lanes 0:128)     1: b_tp (lanes 0:128)
    #   2: BN scale (256)         3: BN shift (256)
    #   4: b_c1 (256)             5: b_c2 lane-padded (lanes 0:128)
    bf16 = jnp.bfloat16

    # image projection: Linear(1280->128) + ReLU  (f32 in, bf16 cast on VPU)
    img_h = jnp.maximum(
        jnp.dot(img_ref[...].astype(bf16), w_ip_ref[...],
                preferred_element_type=jnp.float32)
        + bias_ref[0:1, 0:PROJ_DIM], 0.0)
    # text projection: Linear(768->128) + ReLU
    txt_h = jnp.maximum(
        jnp.dot(txt_ref[...].astype(bf16), w_tp_ref[...],
                preferred_element_type=jnp.float32)
        + bias_ref[1:2, 0:PROJ_DIM], 0.0)

    # concat along lanes (pure vreg placement) + inference BatchNorm1d
    # applied as an elementwise scale/shift in f32 (keeps wc1 un-amplified).
    comb = jnp.concatenate([img_h, txt_h], axis=-1)
    comb = comb * bias_ref[2:3, :] + bias_ref[3:4, :]

    # classifier: Linear(256->256) + ReLU  (Dropout = identity at inference)
    h = jnp.maximum(
        jnp.dot(comb.astype(bf16), wc1_ref[...],
                preferred_element_type=jnp.float32)
        + bias_ref[4:5, :], 0.0)

    # classifier tail Linear(256->4), lane-padded to 128 for an unmasked store
    out_ref[...] = (
        jnp.dot(h.astype(bf16), wc2_ref[...],
                preferred_element_type=jnp.float32)
        + bias_ref[5:6, 0:OUT_PAD])


# ---------------------------------------------------------------------------
# Wrapper: parameter packing + batch-tiled pallas_call.
# ---------------------------------------------------------------------------
def _prepare_params(p):
    # Inference-mode BatchNorm1d -> per-lane scale/shift (applied in-kernel):
    #   s = gamma * rsqrt(var + eps),  c = beta - mean * s
    s_i = p["bn_i_gamma"] * jax.lax.rsqrt(p["bn_i_var"] + BN_EPS)
    c_i = p["bn_i_beta"] - p["bn_i_mean"] * s_i
    s_t = p["bn_t_gamma"] * jax.lax.rsqrt(p["bn_t_var"] + BN_EPS)
    c_t = p["bn_t_beta"] - p["bn_t_mean"] * s_t

    # Lane-pad classifier tail 4 -> 128.
    wc2_pad = jnp.zeros((HIDDEN_DIM, OUT_PAD), jnp.float32)
    wc2_pad = wc2_pad.at[:, :NUM_CLASSES].set(p["w_c2"])

    # Pack all small per-lane vectors into one f32 operand (fewer tiny DMAs).
    bias_pack = jnp.zeros((6, HIDDEN_DIM), jnp.float32)
    bias_pack = bias_pack.at[0, :PROJ_DIM].set(p["b_ip"])
    bias_pack = bias_pack.at[1, :PROJ_DIM].set(p["b_tp"])
    bias_pack = bias_pack.at[2, :].set(jnp.concatenate([s_i, s_t]))
    bias_pack = bias_pack.at[3, :].set(jnp.concatenate([c_i, c_t]))
    bias_pack = bias_pack.at[4, :].set(p["b_c1"])
    bias_pack = bias_pack.at[5, :NUM_CLASSES].set(p["b_c2"])

    bf16 = jnp.bfloat16
    return (p["w_ip"].astype(bf16), p["w_tp"].astype(bf16),
            p["w_c1"].astype(bf16), wc2_pad.astype(bf16), bias_pack)


def _pick_batch_tile(B):
    # B <= 128: one full-batch tile (block dims equal the array dims, so no
    # sublane-alignment constraint and no padding of any kind).
    if B <= 128:
        return B
    # Otherwise: tiles of up to 512 rows (16-aligned), capped near B/2 so the
    # grid has >= 2 "parallel" steps for v7x's two TensorCores.
    half = -(-B // 2)
    return min(512, -(-half // 16) * 16)


def multimodal_head(img_features, cls_output, params):
    """img_features: [B, 1280] f32, cls_output: [B, 768] f32 -> logits [B, 4]."""
    B = img_features.shape[0]
    TB = _pick_batch_tile(B)
    grid = pl.cdiv(B, TB)   # ragged last tile handled by Pallas boundary blocks

    w_ip, w_tp, wc1, wc2, bias_pack = _prepare_params(params)

    const = lambda i: (0, 0)   # weights/biases: VMEM-resident across the grid
    out = pl.pallas_call(
        _head_kernel,
        out_shape=jax.ShapeDtypeStruct((B, OUT_PAD), jnp.float32),
        grid=(grid,),
        in_specs=[
            pl.BlockSpec((TB, IMG_FEAT_DIM), lambda i: (i, 0)),
            pl.BlockSpec((TB, TXT_FEAT_DIM), lambda i: (i, 0)),
            pl.BlockSpec((IMG_FEAT_DIM, PROJ_DIM), const),
            pl.BlockSpec((TXT_FEAT_DIM, PROJ_DIM), const),
            pl.BlockSpec((2 * PROJ_DIM, HIDDEN_DIM), const),
            pl.BlockSpec((HIDDEN_DIM, OUT_PAD), const),
            pl.BlockSpec((6, HIDDEN_DIM), const),
        ],
        out_specs=pl.BlockSpec((TB, OUT_PAD), lambda i: (i, 0)),
        compiler_params=pltpu.CompilerParams(
            dimension_semantics=("parallel",),
            # footprint at TB=512 (double-buffered f32 activation tiles +
            # resident bf16 weights + output tiles) is ~10 MiB; 32 MiB leaves
            # headroom and stays far below v7x's 64 MiB physical VMEM.
            vmem_limit_bytes=32 << 20,
        ),
    )(img_features, cls_output, w_ip, w_tp, wc1, wc2, bias_pack)
    return out[:B, :NUM_CLASSES]


# ---------------------------------------------------------------------------
# Deterministic parameter init + stub backbones (plain-JAX glue).
# ---------------------------------------------------------------------------
def init_params(key):
    ks = jax.random.split(key, 12)
    s = 0.02
    return {
        "w_ip": s * jax.random.normal(ks[0], (IMG_FEAT_DIM, PROJ_DIM), jnp.float32),
        "b_ip": s * jax.random.normal(ks[1], (PROJ_DIM,), jnp.float32),
        "bn_i_gamma": 1.0 + 0.1 * jax.random.normal(ks[2], (PROJ_DIM,), jnp.float32),
        "bn_i_beta": 0.1 * jax.random.normal(ks[3], (PROJ_DIM,), jnp.float32),
        "bn_i_mean": 0.1 * jax.random.normal(ks[4], (PROJ_DIM,), jnp.float32),
        "bn_i_var": jnp.abs(1.0 + 0.1 * jax.random.normal(ks[5], (PROJ_DIM,), jnp.float32)),
        "w_tp": s * jax.random.normal(ks[6], (TXT_FEAT_DIM, PROJ_DIM), jnp.float32),
        "b_tp": s * jax.random.normal(ks[7], (PROJ_DIM,), jnp.float32),
        "bn_t_gamma": jnp.ones((PROJ_DIM,), jnp.float32),
        "bn_t_beta": jnp.zeros((PROJ_DIM,), jnp.float32),
        "bn_t_mean": jnp.zeros((PROJ_DIM,), jnp.float32),
        "bn_t_var": jnp.ones((PROJ_DIM,), jnp.float32),
        "w_c1": s * jax.random.normal(ks[8], (2 * PROJ_DIM, HIDDEN_DIM), jnp.float32),
        "b_c1": s * jax.random.normal(ks[9], (HIDDEN_DIM,), jnp.float32),
        "w_c2": s * jax.random.normal(ks[10], (HIDDEN_DIM, NUM_CLASSES), jnp.float32),
        "b_c2": s * jax.random.normal(ks[11], (NUM_CLASSES,), jnp.float32),
    }


# TODO(synk): the real image_model (EfficientNet, 1280-d features with
# classifier=Identity) and text_model (BERT, 768-d last_hidden_state) are
# external modules passed to __init__; they are replaced here by small
# deterministic stubs that only reproduce the feature shapes.
def stub_image_backbone(image, key):
    B, C, H, W = image.shape
    w = 0.05 * jax.random.normal(key, (C, IMG_FEAT_DIM), jnp.float32)
    pooled = image.mean(axis=(2, 3))            # global average pool [B, C]
    return pooled @ w                           # [B, 1280]


def stub_text_backbone(input_ids, attention_mask, key, vocab=100):
    emb = 0.05 * jax.random.normal(key, (vocab, TXT_FEAT_DIM), jnp.float32)
    hidden = emb[input_ids] * attention_mask[..., None].astype(jnp.float32)
    return hidden[:, 0, :]                      # CLS token [B, 768]


def reference_head(img_features, cls_output, p):
    def bn(x, g, b, m, v):
        return (x - m) * jax.lax.rsqrt(v + BN_EPS) * g + b
    ip = bn(jnp.maximum(img_features @ p["w_ip"] + p["b_ip"], 0.0),
            p["bn_i_gamma"], p["bn_i_beta"], p["bn_i_mean"], p["bn_i_var"])
    tp = bn(jnp.maximum(cls_output @ p["w_tp"] + p["b_tp"], 0.0),
            p["bn_t_gamma"], p["bn_t_beta"], p["bn_t_mean"], p["bn_t_var"])
    comb = jnp.concatenate([ip, tp], axis=1)
    h = jnp.maximum(comb @ p["w_c1"] + p["b_c1"], 0.0)
    return h @ p["w_c2"] + p["b_c2"]


if __name__ == "__main__":
    key = jax.random.PRNGKey(0)
    k_param, k_img, k_ids, k_bimg, k_btxt = jax.random.split(key, 5)

    B, C, H, W, S = 2, 3, 32, 32, 8
    image = jax.random.normal(k_img, (B, C, H, W), jnp.float32)      # NCHW
    input_ids = jax.random.randint(k_ids, (B, S), 0, 100, jnp.int32)
    attention_mask = jnp.ones((B, S), jnp.int32)

    params = init_params(k_param)

    img_features = stub_image_backbone(image, k_bimg)                   # [B, 1280]
    cls_output = stub_text_backbone(input_ids, attention_mask, k_btxt)  # [B, 768]

    out = multimodal_head(img_features, cls_output, params)
    out = jax.block_until_ready(out)

    ref = reference_head(img_features, cls_output, params)
    assert out.shape == (B, NUM_CLASSES)
    # bf16 weight/activation stream with f32 accumulation -> loosened tolerance.
    assert jnp.allclose(out, ref, atol=5e-3, rtol=5e-2), \
        float(jnp.max(jnp.abs(out - ref)))

    print("KERNEL_OK")
</pallas_src>

<mosaic_0001>
module attributes {stable_mosaic.version = 11 : i64} {
  func.func @_head_kernel(%arg0: i32, %arg1: memref<2x1280xf32, #tpu.memory_space<vmem>>, %arg2: memref<2x768xf32, #tpu.memory_space<vmem>>, %arg3: memref<1280x128xbf16, #tpu.memory_space<vmem>>, %arg4: memref<768x128xbf16, #tpu.memory_space<vmem>>, %arg5: memref<256x256xbf16, #tpu.memory_space<vmem>>, %arg6: memref<256x128xbf16, #tpu.memory_space<vmem>>, %arg7: memref<6x256xf32, #tpu.memory_space<vmem>>, %arg8: memref<2x128xf32, #tpu.memory_space<vmem>>) attributes {dimension_semantics = [#tpu.dimension_semantics<parallel>], iteration_bounds = array<i64: 1>, scalar_prefetch = 0 : i64, scratch_operands = 0 : i64, tpu.core_type = #tpu.core_type<tc>, window_params = [{transform_indices = @transform_0, window_bounds = array<i64: 2, 1280>}, {transform_indices = @transform_1, window_bounds = array<i64: 2, 768>}, {pipeline_mode = #tpu.pipeline_mode<synchronous>, transform_indices = @transform_2, window_bounds = array<i64: 1280, 128>}, {pipeline_mode = #tpu.pipeline_mode<synchronous>, transform_indices = @transform_3, window_bounds = array<i64: 768, 128>}, {pipeline_mode = #tpu.pipeline_mode<synchronous>, transform_indices = @transform_4, window_bounds = array<i64: 256, 256>}, {pipeline_mode = #tpu.pipeline_mode<synchronous>, transform_indices = @transform_5, window_bounds = array<i64: 256, 128>}, {pipeline_mode = #tpu.pipeline_mode<synchronous>, transform_indices = @transform_6, window_bounds = array<i64: 6, 256>}, {transform_indices = @transform_7, window_bounds = array<i64: 2, 128>}]} {
    %c0 = arith.constant 0 : index
    %c0_0 = arith.constant 0 : index
    %0 = vector.load %arg1[%c0, %c0_0] : memref<2x1280xf32, #tpu.memory_space<vmem>>, vector<2x1280xf32>
    %1 = arith.truncf %0 : vector<2x1280xf32> to vector<2x1280xbf16>
    %c0_1 = arith.constant 0 : index
    %c0_2 = arith.constant 0 : index
    %2 = vector.load %arg3[%c0_1, %c0_2] : memref<1280x128xbf16, #tpu.memory_space<vmem>>, vector<1280x128xbf16>
    %cst = arith.constant dense<0.000000e+00> : vector<2x128xf32>
    %3 = tpu.matmul %1, %2, %cst {dimension_numbers = #tpu.dot_dimension_numbers<[1], [0], [0], [1], [0, 0, 1, 1], [], []>} : vector<2x1280xbf16>, vector<1280x128xbf16>, vector<2x128xf32> -> vector<2x128xf32>
    %c0_3 = arith.constant 0 : index
    %c0_4 = arith.constant 0 : index
    %4 = vector.load %arg7[%c0_3, %c0_4] : memref<6x256xf32, #tpu.memory_space<vmem>>, vector<1x128xf32>
    %5 = vector.broadcast %4 : vector<1x128xf32> to vector<2x128xf32>
    %6 = arith.addf %3, %5 : vector<2x128xf32>
    %cst_5 = arith.constant 0.000000e+00 : f32
    %7 = vector.broadcast %cst_5 : f32 to vector<2x128xf32>
    %8 = arith.maximumf %6, %7 : vector<2x128xf32>
    %c0_6 = arith.constant 0 : index
    %c0_7 = arith.constant 0 : index
    %9 = vector.load %arg2[%c0_6, %c0_7] : memref<2x768xf32, #tpu.memory_space<vmem>>, vector<2x768xf32>
    %10 = arith.truncf %9 : vector<2x768xf32> to vector<2x768xbf16>
    %c0_8 = arith.constant 0 : index
    %c0_9 = arith.constant 0 : index
    %11 = vector.load %arg4[%c0_8, %c0_9] : memref<768x128xbf16, #tpu.memory_space<vmem>>, vector<768x128xbf16>
    %cst_10 = arith.constant dense<0.000000e+00> : vector<2x128xf32>
    %12 = tpu.matmul %10, %11, %cst_10 {dimension_numbers = #tpu.dot_dimension_numbers<[1], [0], [0], [1], [0, 0, 1, 1], [], []>} : vector<2x768xbf16>, vector<768x128xbf16>, vector<2x128xf32> -> vector<2x128xf32>
    %c1 = arith.constant 1 : index
    %c0_11 = arith.constant 0 : index
    %13 = vector.load %arg7[%c1, %c0_11] : memref<6x256xf32, #tpu.memory_space<vmem>>, vector<1x128xf32>
    %14 = vector.broadcast %13 : vector<1x128xf32> to vector<2x128xf32>
    %15 = arith.addf %12, %14 : vector<2x128xf32>
    %cst_12 = arith.constant 0.000000e+00 : f32
    %16 = vector.broadcast %cst_12 : f32 to vector<2x128xf32>
    %17 = arith.maximumf %15, %16 : vector<2x128xf32>
    %18 = tpu.concatenate %8, %17 in 1 : vector<2x128xf32>, vector<2x128xf32> -> vector<2x256xf32>
    %c2 = arith.constant 2 : index
    %c0_13 = arith.constant 0 : index
    %19 = vector.load %arg7[%c2, %c0_13] : memref<6x256xf32, #tpu.memory_space<vmem>>, vector<1x256xf32>
    %20 = vector.broadcast %19 : vector<1x256xf32> to vector<2x256xf32>
    %21 = arith.mulf %18, %20 : vector<2x256xf32>
    %c3 = arith.constant 3 : index
    %c0_14 = arith.constant 0 : index
    %22 = vector.load %arg7[%c3, %c0_14] : memref<6x256xf32, #tpu.memory_space<vmem>>, vector<1x256xf32>
    %23 = vector.broadcast %22 : vector<1x256xf32> to vector<2x256xf32>
    %24 = arith.addf %21, %23 : vector<2x256xf32>
    %25 = arith.truncf %24 : vector<2x256xf32> to vector<2x256xbf16>
    %c0_15 = arith.constant 0 : index
    %c0_16 = arith.constant 0 : index
    %26 = vector.load %arg5[%c0_15, %c0_16] : memref<256x256xbf16, #tpu.memory_space<vmem>>, vector<256x256xbf16>
    %cst_17 = arith.constant dense<0.000000e+00> : vector<2x256xf32>
    %27 = tpu.matmul %25, %26, %cst_17 {dimension_numbers = #tpu.dot_dimension_numbers<[1], [0], [0], [1], [0, 0, 1, 1], [], []>} : vector<2x256xbf16>, vector<256x256xbf16>, vector<2x256xf32> -> vector<2x256xf32>
    %c4 = arith.constant 4 : index
    %c0_18 = arith.constant 0 : index
    %28 = vector.load %arg7[%c4, %c0_18] : memref<6x256xf32, #tpu.memory_space<vmem>>, vector<1x256xf32>
    %29 = vector.broadcast %28 : vector<1x256xf32> to vector<2x256xf32>
    %30 = arith.addf %27, %29 : vector<2x256xf32>
    %cst_19 = arith.constant 0.000000e+00 : f32
    %31 = vector.broadcast %cst_19 : f32 to vector<2x256xf32>
    %32 = arith.maximumf %30, %31 : vector<2x256xf32>
    %33 = arith.truncf %32 : vector<2x256xf32> to vector<2x256xbf16>
    %c0_20 = arith.constant 0 : index
    %c0_21 = arith.constant 0 : index
    %34 = vector.load %arg6[%c0_20, %c0_21] : memref<256x128xbf16, #tpu.memory_space<vmem>>, vector<256x128xbf16>
    %cst_22 = arith.constant dense<0.000000e+00> : vector<2x128xf32>
    %35 = tpu.matmul %33, %34, %cst_22 {dimension_numbers = #tpu.dot_dimension_numbers<[1], [0], [0], [1], [0, 0, 1, 1], [], []>} : vector<2x256xbf16>, vector<256x128xbf16>, vector<2x128xf32> -> vector<2x128xf32>
    %c5 = arith.constant 5 : index
    %c0_23 = arith.constant 0 : index
    %36 = vector.load %arg7[%c5, %c0_23] : memref<6x256xf32, #tpu.memory_space<vmem>>, vector<1x128xf32>
    %37 = vector.broadcast %36 : vector<1x128xf32> to vector<2x128xf32>
    %38 = arith.addf %35, %37 : vector<2x128xf32>
    %c0_24 = arith.constant 0 : index
    %c0_25 = arith.constant 0 : index
    %39 = vector.load %arg8[%c0_24, %c0_25] : memref<2x128xf32, #tpu.memory_space<vmem>>, vector<2x128xf32>
    tpu.vector_store %arg8[%c0_24, %c0_25], %38 {strides = array<i32>} : memref<2x128xf32, #tpu.memory_space<vmem>>, vector<2x128xf32>,
    return
  }
  func.func @transform_0(%arg0: i32) -> (i32, i32) {
    %c0_i32 = arith.constant 0 : i32
    %c0_i32_0 = arith.constant 0 : i32
    return %arg0, %c0_i32 : i32, i32
  }
  func.func @transform_1(%arg0: i32) -> (i32, i32) {
    %c0_i32 = arith.constant 0 : i32
    %c0_i32_0 = arith.constant 0 : i32
    return %arg0, %c0_i32 : i32, i32
  }
  func.func @transform_2(%arg0: i32) -> (i32, i32) {
    %c0_i32 = arith.constant 0 : i32
    %c0_i32_0 = arith.constant 0 : i32
    %c0_i32_1 = arith.constant 0 : i32
    return %c0_i32, %c0_i32_0 : i32, i32
  }
  func.func @transform_3(%arg0: i32) -> (i32, i32) {
    %c0_i32 = arith.constant 0 : i32
    %c0_i32_0 = arith.constant 0 : i32
    %c0_i32_1 = arith.constant 0 : i32
    return %c0_i32, %c0_i32_0 : i32, i32
  }
  func.func @transform_4(%arg0: i32) -> (i32, i32) {
    %c0_i32 = arith.constant 0 : i32
    %c0_i32_0 = arith.constant 0 : i32
    %c0_i32_1 = arith.constant 0 : i32
    return %c0_i32, %c0_i32_0 : i32, i32
  }
  func.func @transform_5(%arg0: i32) -> (i32, i32) {
    %c0_i32 = arith.constant 0 : i32
    %c0_i32_0 = arith.constant 0 : i32
    %c0_i32_1 = arith.constant 0 : i32
    return %c0_i32, %c0_i32_0 : i32, i32
  }
  func.func @transform_6(%arg0: i32) -> (i32, i32) {
    %c0_i32 = arith.constant 0 : i32
    %c0_i32_0 = arith.constant 0 : i32
    %c0_i32_1 = arith.constant 0 : i32
    return %c0_i32, %c0_i32_0 : i32, i32
  }
  func.func @transform_7(%arg0: i32) -> (i32, i32) {
    %c0_i32 = arith.constant 0 : i32
    %c0_i32_0 = arith.constant 0 : i32
    return %arg0, %c0_i32 : i32, i32
  }
}

</mosaic_0001>

<llo_original>
// kernel: tpu_custom_call.1
$region0: #{tpu_custom_call.1}
  #allocation0 [shape = 'u32[]', space=smem, size = 0x4, offset = 0x4, fixed_abs, tag = 'smem constant byte address 0x4 - core index']
  #allocation1 [shape = 'u32[144,128]{1,0:T(1,128)}', space=vmem, size = 0x12000, scoped, tag = 'internal scratch']
  %s0 = inlined_call_operand.hbm [shape: f32[2,1280], index: 0, kind: input, shape index: {}]
  %s1 = inlined_call_operand.hbm [shape: f32[2,768], index: 1, kind: input, shape index: {}]
  %s2 = inlined_call_operand.hbm [shape: bf16[1280,128], index: 2, kind: input, shape index: {}]
  %s3 = inlined_call_operand.hbm [shape: bf16[768,128], index: 3, kind: input, shape index: {}]
  %s4 = inlined_call_operand.hbm [shape: bf16[256,256], index: 4, kind: input, shape index: {}]
  %s5 = inlined_call_operand.hbm [shape: bf16[256,128], index: 5, kind: input, shape index: {}]
  %s6 = inlined_call_operand.vmem [shape: f32[6,256], index: 6, kind: input, shape index: {}]
  %s7 = inlined_call_operand.hbm [shape: f32[2,128], index: 7, kind: output, shape index: {}]
  %s8 = sld [smem:[#allocation0]]
  $region62: #{tpu_custom_call.1} parent=0
    _
  %s10 = ssub.s32 1, %s8
  %s11 = scalar_select 0, %s10, %s8
  $region1: #{tpu_custom_call.1} parent=0
    #allocation2 [shape = 'u8[10240]{0}', space=vmem, size = 0x2800, scoped, tag = 'input window, operand 0, single buffered']
    #allocation3 [shape = 's32[1]{0}', space=sflag, size = 0x4, scoped, tag = 'scoped memory for tpu_custom_call.1']
    #allocation4 [shape = 's32[1]{0}', space=sflag, size = 0x4, scoped, tag = 'scoped memory for tpu_custom_call.1']
    #allocation5 [shape = 'u8[6144]{0}', space=vmem, size = 0x1800, scoped, tag = 'input window, operand 1, single buffered']
    #allocation6 [shape = 's32[1]{0}', space=sflag, size = 0x4, scoped, tag = 'scoped memory for tpu_custom_call.1']
    #allocation7 [shape = 'u8[327680]{0}', space=vmem, size = 0x50000, scoped, tag = 'input window, operand 2, single buffered']
    #allocation8 [shape = 'u8[196608]{0}', space=vmem, size = 0x30000, scoped, tag = 'input window, operand 3, single buffered']
    #allocation9 [shape = 's32[1]{0}', space=sflag, size = 0x4, scoped, tag = 'scoped memory for tpu_custom_call.1']
    #allocation10 [shape = 'u8[131072]{0}', space=vmem, size = 0x20000, scoped, tag = 'input window, operand 4, single buffered']
    #allocation11 [shape = 'u8[65536]{0}', space=vmem, size = 0x10000, scoped, tag = 'input window, operand 5, single buffered']
    #allocation12 [shape = 's32[1]{0}', space=sflag, size = 0x4, scoped, tag = 'scoped memory for tpu_custom_call.1']
    #allocation13 [shape = 'u8[1024]{0}', space=vmem, size = 0x400, scoped, tag = 'output window, operand 0, single buffered']
    %12 = vsyncpa [#allocation3], 0
    %13 = vsyncpa [#allocation6], 0
    %14 = vsyncpa [#allocation9], 0
    %15 = vsyncpa [#allocation12], 0
    %16 = vsyncpa [#allocation4], 0
    // Predicated region
    $region2: #{tpu_custom_call.1} parent=1 // pred_check
      _
    $region3: #{tpu_custom_call.1} parent=1 // pred_check_branch
      %18 = sbr.rel (0) target = $region5
    $region4: #{tpu_custom_call.1} parent=1 // pred_region
      %s20 = ssub.s32 320, 320
      %21 = vsyncadd [#allocation3], %s20
      %s23 = sshll.u32 [#allocation2], 4
      %s24 = int_to_ptr.vmem [resolvable:$true] %s23
      %26 = dma.hbm_to_vmem [thread:$0]  %s0, 320, %s24, [#allocation3]
    $region5: #{tpu_custom_call.1} parent=1 // pred_fallthru
      _
    // Predicated region
    $region6: #{tpu_custom_call.1} parent=1 // pred_check
      _
    $region7: #{tpu_custom_call.1} parent=1 // pred_check_branch
      %28 = sbr.rel (0) target = $region9
    $region8: #{tpu_custom_call.1} parent=1 // pred_region
      %s30 = ssub.s32 192, 192
      %31 = vsyncadd [#allocation6], %s30
      %s33 = sshll.u32 [#allocation5], 4
      %s34 = int_to_ptr.vmem [resolvable:$true] %s33
      %36 = dma.hbm_to_vmem [thread:$0]  %s1, 192, %s34, [#allocation6]
    $region9: #{tpu_custom_call.1} parent=1 // pred_fallthru
      _
    // Predicated region
    $region10: #{tpu_custom_call.1} parent=1 // pred_check
      _
    $region11: #{tpu_custom_call.1} parent=1 // pred_check_branch
      %38 = sbr.rel (0) target = $region13
    $region12: #{tpu_custom_call.1} parent=1 // pred_region
      %s40 = ssub.s32 10240, 10240
      %41 = vsyncadd [#allocation6], %s40
      %s42 = sshll.u32 [#allocation7], 4
      %s43 = int_to_ptr.vmem [resolvable:$true] %s42
      %48 = dma.hbm_to_vmem [thread:$0]  %s2, 10240, %s43, [#allocation6], 64, 64, 4
    $region13: #{tpu_custom_call.1} parent=1 // pred_fallthru
      _
    // Predicated region
    $region14: #{tpu_custom_call.1} parent=1 // pred_check
      _
    $region15: #{tpu_custom_call.1} parent=1 // pred_check_branch
      %50 = sbr.rel (0) target = $region17
    $region16: #{tpu_custom_call.1} parent=1 // pred_region
      %s52 = ssub.s32 6144, 6144
      %53 = vsyncadd [#allocation9], %s52
      %s54 = sshll.u32 [#allocation8], 4
      %s55 = int_to_ptr.vmem [resolvable:$true] %s54
      %60 = dma.hbm_to_vmem [thread:$0]  %s3, 6144, %s55, [#allocation9], 64, 64, 4
    $region17: #{tpu_custom_call.1} parent=1 // pred_fallthru
      _
    // Predicated region
    $region18: #{tpu_custom_call.1} parent=1 // pred_check
      _
    $region19: #{tpu_custom_call.1} parent=1 // pred_check_branch
      %62 = sbr.rel (0) target = $region21
    $region20: #{tpu_custom_call.1} parent=1 // pred_region
      %s64 = ssub.s32 4096, 4096
      %65 = vsyncadd [#allocation9], %s64
      %s66 = sshll.u32 [#allocation10], 4
      %s67 = int_to_ptr.vmem [resolvable:$true] %s66
      %72 = dma.hbm_to_vmem [thread:$0]  %s4, 4096, %s67, [#allocation9], 128, 128, 8
    $region21: #{tpu_custom_call.1} parent=1 // pred_fallthru
      _
    // Predicated region
    $region22: #{tpu_custom_call.1} parent=1 // pred_check
      _
    $region23: #{tpu_custom_call.1} parent=1 // pred_check_branch
      %74 = sbr.rel (0) target = $region25
    $region24: #{tpu_custom_call.1} parent=1 // pred_region
      %s76 = ssub.s32 2048, 2048
      %77 = vsyncadd [#allocation12], %s76
      %s78 = sshll.u32 [#allocation11], 4
      %s79 = int_to_ptr.vmem [resolvable:$true] %s78
      %84 = dma.hbm_to_vmem [thread:$0]  %s5, 2048, %s79, [#allocation12], 64, 64, 4
    $region25: #{tpu_custom_call.1} parent=1 // pred_fallthru
      _
    // Predicated region
    $region26: #{tpu_custom_call.1} parent=1 // pred_check
      _
    $region27: #{tpu_custom_call.1} parent=1 // pred_check_branch
      %86 = sbr.rel (0) target = $region29
    $region28: #{tpu_custom_call.1} parent=1 // pred_region
      _
    $region29: #{tpu_custom_call.1} parent=1 // pred_fallthru
      _
    // Predicated region
    $region30: #{tpu_custom_call.1} parent=1 // pred_check
      _
    $region31: #{tpu_custom_call.1} parent=1 // pred_check_branch
      %88 = sbr.rel (0) target = $region33
    $region32: #{tpu_custom_call.1} parent=1 // pred_region
      %89 = dma.done [#allocation3], 320
    $region33: #{tpu_custom_call.1} parent=1 // pred_fallthru
      _
    // Predicated region
    $region34: #{tpu_custom_call.1} parent=1 // pred_check
      _
    $region35: #{tpu_custom_call.1} parent=1 // pred_check_branch
      %91 = sbr.rel (0) target = $region37
    $region36: #{tpu_custom_call.1} parent=1 // pred_region
      %92 = dma.done [#allocation6], 192
    $region37: #{tpu_custom_call.1} parent=1 // pred_fallthru
      _
    // Predicated region
    $region38: #{tpu_custom_call.1} parent=1 // pred_check
      _
    $region39: #{tpu_custom_call.1} parent=1 // pred_check_branch
      %94 = sbr.rel (0) target = $region41
    $region40: #{tpu_custom_call.1} parent=1 // pred_region
      %95 = dma.done [#allocation6], 10240
    $region41: #{tpu_custom_call.1} parent=1 // pred_fallthru
      _
    // Predicated region
    $region42: #{tpu_custom_call.1} parent=1 // pred_check
      _
    $region43: #{tpu_custom_call.1} parent=1 // pred_check_branch
      %97 = sbr.rel (0) target = $region45
    $region44: #{tpu_custom_call.1} parent=1 // pred_region
      %98 = dma.done [#allocation9], 6144
    $region45: #{tpu_custom_call.1} parent=1 // pred_fallthru
      _
    // Predicated region
    $region46: #{tpu_custom_call.1} parent=1 // pred_check
      _
    $region47: #{tpu_custom_call.1} parent=1 // pred_check_branch
      %100 = sbr.rel (0) target = $region49
    $region48: #{tpu_custom_call.1} parent=1 // pred_region
      %101 = dma.done [#allocation9], 4096
    $region49: #{tpu_custom_call.1} parent=1 // pred_fallthru
      _
    // Predicated region
    $region50: #{tpu_custom_call.1} parent=1 // pred_check
      _
    $region51: #{tpu_custom_call.1} parent=1 // pred_check_branch
      %103 = sbr.rel (0) target = $region53
    $region52: #{tpu_custom_call.1} parent=1 // pred_region
      %104 = dma.done [#allocation12], 2048
    $region53: #{tpu_custom_call.1} parent=1 // pred_fallthru
      _
    %v106 = vld [vmem:[#allocation2] sm:$0xff]
    %v107 = vld [vmem:[#allocation2 + $0x8] sm:$0xff]
    %v108 = vld [vmem:[#allocation2 + $0x10] sm:$0xf]
    %v112 = vcombine.high %v106, %v106
    %v114 = vunpack.c.l.s4 1983009808
    %v115 = vunpack.c.0.s8 %v114
    %v116 = vlaneseq
    %v117 = vshrl.u32 %v116, 7
    %v118 = vsub.s32 %v115, %v117
    %v119 = vrot.slane %v106, %v118
    %v121 = vunpack.c.l.s4 1983009808
    %v122 = vunpack.c.0.s8 %v121
    %v123 = vlaneseq
    %v124 = vshrl.u32 %v123, 7
    %v125 = vsub.s32 %v122, %v124
    %v126 = vrot.slane %v112, %v125
    %v127 = vcombine.high %v119, %v119
    %v128 = vcombine.high %v126, %v126
    %v129 = vcombine.high %v107, %v107
    %v131 = vunpack.c.l.s4 1983009808
    %v132 = vunpack.c.0.s8 %v131
    %v133 = vlaneseq
    %v134 = vshrl.u32 %v133, 7
    %v135 = vsub.s32 %v132, %v134
    %v136 = vrot.slane %v107, %v135
    %v138 = vunpack.c.l.s4 1983009808
    %v139 = vunpack.c.0.s8 %v138
    %v140 = vlaneseq
    %v141 = vshrl.u32 %v140, 7
    %v142 = vsub.s32 %v139, %v141
    %v143 = vrot.slane %v129, %v142
    %v144 = vcombine.high %v136, %v136
    %v145 = vcombine.high %v143, %v143
    %v147 = vunpack.c.l.s4 1983009808
    %v148 = vunpack.c.0.s8 %v147
    %v149 = vlaneseq
    %v150 = vshrl.u32 %v149, 7
    %v151 = vsub.s32 %v148, %v150
    %v152 = vrot.slane %v108, %v151
    %v153 = vcombine.high %v152, %v152
    %v164 = vpack.c.bf16 %v119, %v119
    %v165 = vpack.c.bf16 %v127, %v127
    %v166 = vpack.c.bf16 %v126, %v126
    %v167 = vpack.c.bf16 %v128, %v128
    %v168 = vpack.c.bf16 %v136, %v136
    %v169 = vpack.c.bf16 %v144, %v144
    %v170 = vpack.c.bf16 %v143, %v143
    %v171 = vpack.c.bf16 %v145, %v145
    %v172 = vpack.c.bf16 %v152, %v152
    %v173 = vpack.c.bf16 %v153, %v153
    %v174 = vld [vmem:[#allocation7] sm:$0xf]
    %v175 = vld [vmem:[#allocation7 + $0x4] sm:$0xf]
    %v176 = vld [vmem:[#allocation7 + $0x8] sm:$0xf]
    %v177 = vld [vmem:[#allocation7 + $0xc] sm:$0xf]
    %v178 = vld [vmem:[#allocation7 + $0x10] sm:$0xf]
    %v179 = vld [vmem:[#allocation7 + $0x14] sm:$0xf]
    %v180 = vld [vmem:[#allocation7 + $0x18] sm:$0xf]
    %v181 = vld [vmem:[#allocation7 + $0x1c] sm:$0xf]
    %v182 = vld [vmem:[#allocation7 + $0x20] sm:$0xf]
    %v183 = vld [vmem:[#allocation7 + $0x24] sm:$0xf]
    %v184 = vld [vmem:[#allocation7 + $0x28] sm:$0xf]
    %v185 = vld [vmem:[#allocation7 + $0x2c] sm:$0xf]
    %v186 = vld [vmem:[#allocation7 + $0x30] sm:$0xf]
    %v187 = vld [vmem:[#allocation7 + $0x34] sm:$0xf]
    %v188 = vld [vmem:[#allocation7 + $0x38] sm:$0xf]
    %v189 = vld [vmem:[#allocation7 + $0x3c] sm:$0xf]
    %v190 = vld [vmem:[#allocation7 + $0x40] sm:$0xf]
    %v191 = vld [vmem:[#allocation7 + $0x44] sm:$0xf]
    %v192 = vld [vmem:[#allocation7 + $0x48] sm:$0xf]
    %v193 = vld [vmem:[#allocation7 + $0x4c] sm:$0xf]
    %v194 = vld [vmem:[#allocation7 + $0x50] sm:$0xf]
    %v195 = vld [vmem:[#allocation7 + $0x54] sm:$0xf]
    %v196 = vld [vmem:[#allocation7 + $0x58] sm:$0xf]
    %v197 = vld [vmem:[#allocation7 + $0x5c] sm:$0xf]
    %v198 = vld [vmem:[#allocation7 + $0x60] sm:$0xf]
    %v199 = vld [vmem:[#allocation7 + $0x64] sm:$0xf]
    %v200 = vld [vmem:[#allocation7 + $0x68] sm:$0xf]
    %v201 = vld [vmem:[#allocation7 + $0x6c] sm:$0xf]
    %v202 = vld [vmem:[#allocation7 + $0x70] sm:$0xf]
    %v203 = vld [vmem:[#allocation7 + $0x74] sm:$0xf]
    %v204 = vld [vmem:[#allocation7 + $0x78] sm:$0xf]
    %v205 = vld [vmem:[#allocation7 + $0x7c] sm:$0xf]
    %v206 = vld [vmem:[#allocation7 + $0x80] sm:$0xf]
    %v207 = vld [vmem:[#allocation7 + $0x84] sm:$0xf]
    %v208 = vld [vmem:[#allocation7 + $0x88] sm:$0xf]
    %v209 = vld [vmem:[#allocation7 + $0x8c] sm:$0xf]
    %v210 = vld [vmem:[#allocation7 + $0x90] sm:$0xf]
    %v211 = vld [vmem:[#allocation7 + $0x94] sm:$0xf]
    %v212 = vld [vmem:[#allocation7 + $0x98] sm:$0xf]
    %v213 = vld [vmem:[#allocation7 + $0x9c] sm:$0xf]
    %v214 = vld [vmem:[#allocation7 + $0xa0] sm:$0xf]
    %v215 = vld [vmem:[#allocation7 + $0xa4] sm:$0xf]
    %v216 = vld [vmem:[#allocation7 + $0xa8] sm:$0xf]
    %v217 = vld [vmem:[#allocation7 + $0xac] sm:$0xf]
    %v218 = vld [vmem:[#allocation7 + $0xb0] sm:$0xf]
    %v219 = vld [vmem:[#allocation7 + $0xb4] sm:$0xf]
    %v220 = vld [vmem:[#allocation7 + $0xb8] sm:$0xf]
    %v221 = vld [vmem:[#allocation7 + $0xbc] sm:$0xf]
    %v222 = vld [vmem:[#allocation7 + $0xc0] sm:$0xf]
    %v223 = vld [vmem:[#allocation7 + $0xc4] sm:$0xf]
    %v224 = vld [vmem:[#allocation7 + $0xc8] sm:$0xf]
    %v225 = vld [vmem:[#allocation7 + $0xcc] sm:$0xf]
    %v226 = vld [vmem:[#allocation7 + $0xd0] sm:$0xf]
    %v227 = vld [vmem:[#allocation7 + $0xd4] sm:$0xf]
    %v228 = vld [vmem:[#allocation7 + $0xd8] sm:$0xf]
    %v229 = vld [vmem:[#allocation7 + $0xdc] sm:$0xf]
    %v230 = vld [vmem:[#allocation7 + $0xe0] sm:$0xf]
    %v231 = vld [vmem:[#allocation7 + $0xe4] sm:$0xf]
    %v232 = vld [vmem:[#allocation7 + $0xe8] sm:$0xf]
    %v233 = vld [vmem:[#allocation7 + $0xec] sm:$0xf]
    %v234 = vld [vmem:[#allocation7 + $0xf0] sm:$0xf]
    %v235 = vld [vmem:[#allocation7 + $0xf4] sm:$0xf]
    %v236 = vld [vmem:[#allocation7 + $0xf8] sm:$0xf]
    %v237 = vld [vmem:[#allocation7 + $0xfc] sm:$0xf]
    %v238 = vld [vmem:[#allocation7 + $0x100] sm:$0xf]
    %v239 = vld [vmem:[#allocation7 + $0x104] sm:$0xf]
    %v240 = vld [vmem:[#allocation7 + $0x108] sm:$0xf]
    %v241 = vld [vmem:[#allocation7 + $0x10c] sm:$0xf]
    %v242 = vld [vmem:[#allocation7 + $0x110] sm:$0xf]
    %v243 = vld [vmem:[#allocation7 + $0x114] sm:$0xf]
    %v244 = vld [vmem:[#allocation7 + $0x118] sm:$0xf]
    %v245 = vld [vmem:[#allocation7 + $0x11c] sm:$0xf]
    %v246 = vld [vmem:[#allocation7 + $0x120] sm:$0xf]
    %v247 = vld [vmem:[#allocation7 + $0x124] sm:$0xf]
    %v248 = vld [vmem:[#allocation7 + $0x128] sm:$0xf]
    %v249 = vld [vmem:[#allocation7 + $0x12c] sm:$0xf]
    %v250 = vld [vmem:[#allocation7 + $0x130] sm:$0xf]
    %v251 = vld [vmem:[#allocation7 + $0x134] sm:$0xf]
    %v252 = vld [vmem:[#allocation7 + $0x138] sm:$0xf]
    %v253 = vld [vmem:[#allocation7 + $0x13c] sm:$0xf]
    %v254 = vld [vmem:[#allocation7 + $0x140] sm:$0xf]
    %v255 = vld [vmem:[#allocation7 + $0x144] sm:$0xf]
    %v256 = vld [vmem:[#allocation7 + $0x148] sm:$0xf]
    %v257 = vld [vmem:[#allocation7 + $0x14c] sm:$0xf]
    %v258 = vld [vmem:[#allocation7 + $0x150] sm:$0xf]
    %v259 = vld [vmem:[#allocation7 + $0x154] sm:$0xf]
    %v260 = vld [vmem:[#allocation7 + $0x158] sm:$0xf]
    %v261 = vld [vmem:[#allocation7 + $0x15c] sm:$0xf]
    %v262 = vld [vmem:[#allocation7 + $0x160] sm:$0xf]
    %v263 = vld [vmem:[#allocation7 + $0x164] sm:$0xf]
    %v264 = vld [vmem:[#allocation7 + $0x168] sm:$0xf]
    %v265 = vld [vmem:[#allocation7 + $0x16c] sm:$0xf]
    %v266 = vld [vmem:[#allocation7 + $0x170] sm:$0xf]
    %v267 = vld [vmem:[#allocation7 + $0x174] sm:$0xf]
    %v268 = vld [vmem:[#allocation7 + $0x178] sm:$0xf]
    %v269 = vld [vmem:[#allocation7 + $0x17c] sm:$0xf]
    %v270 = vld [vmem:[#allocation7 + $0x180] sm:$0xf]
    %v271 = vld [vmem:[#allocation7 + $0x184] sm:$0xf]
    %v272 = vld [vmem:[#allocation7 + $0x188] sm:$0xf]
    %v273 = vld [vmem:[#allocation7 + $0x18c] sm:$0xf]
    %v274 = vld [vmem:[#allocation7 + $0x190] sm:$0xf]
    %v275 = vld [vmem:[#allocation7 + $0x194] sm:$0xf]
    %v276 = vld [vmem:[#allocation7 + $0x198] sm:$0xf]
    %v277 = vld [vmem:[#allocation7 + $0x19c] sm:$0xf]
    %v278 = vld [vmem:[#allocation7 + $0x1a0] sm:$0xf]
    %v279 = vld [vmem:[#allocation7 + $0x1a4] sm:$0xf]
    %v280 = vld [vmem:[#allocation7 + $0x1a8] sm:$0xf]
    %v281 = vld [vmem:[#allocation7 + $0x1ac] sm:$0xf]
    %v282 = vld [vmem:[#allocation7 + $0x1b0] sm:$0xf]
    %v283 = vld [vmem:[#allocation7 + $0x1b4] sm:$0xf]
    %v284 = vld [vmem:[#allocation7 + $0x1b8] sm:$0xf]
    %v285 = vld [vmem:[#allocation7 + $0x1bc] sm:$0xf]
    %v286 = vld [vmem:[#allocation7 + $0x1c0] sm:$0xf]
    %v287 = vld [vmem:[#allocation7 + $0x1c4] sm:$0xf]
    %v288 = vld [vmem:[#allocation7 + $0x1c8] sm:$0xf]
    %v289 = vld [vmem:[#allocation7 + $0x1cc] sm:$0xf]
    %v290 = vld [vmem:[#allocation7 + $0x1d0] sm:$0xf]
    %v291 = vld [vmem:[#allocation7 + $0x1d4] sm:$0xf]
    %v292 = vld [vmem:[#allocation7 + $0x1d8] sm:$0xf]
    %v293 = vld [vmem:[#allocation7 + $0x1dc] sm:$0xf]
    %v294 = vld [vmem:[#allocation7 + $0x1e0] sm:$0xf]
    %v295 = vld [vmem:[#allocation7 + $0x1e4] sm:$0xf]
    %v296 = vld [vmem:[#allocation7 + $0x1e8] sm:$0xf]
    %v297 = vld [vmem:[#allocation7 + $0x1ec] sm:$0xf]
    %v298 = vld [vmem:[#allocation7 + $0x1f0] sm:$0xf]
    %v299 = vld [vmem:[#allocation7 + $0x1f4] sm:$0xf]
    %v300 = vld [vmem:[#allocation7 + $0x1f8] sm:$0xf]
    %v301 = vld [vmem:[#allocation7 + $0x1fc] sm:$0xf]
    %v302 = vld [vmem:[#allocation7 + $0x200] sm:$0xf]
    %v303 = vld [vmem:[#allocation7 + $0x204] sm:$0xf]
    %v304 = vld [vmem:[#allocation7 + $0x208] sm:$0xf]
    %v305 = vld [vmem:[#allocation7 + $0x20c] sm:$0xf]
    %v306 = vld [vmem:[#allocation7 + $0x210] sm:$0xf]
    %v307 = vld [vmem:[#allocation7 + $0x214] sm:$0xf]
    %v308 = vld [vmem:[#allocation7 + $0x218] sm:$0xf]
    %v309 = vld [vmem:[#allocation7 + $0x21c] sm:$0xf]
    %v310 = vld [vmem:[#allocation7 + $0x220] sm:$0xf]
    %v311 = vld [vmem:[#allocation7 + $0x224] sm:$0xf]
    %v312 = vld [vmem:[#allocation7 + $0x228] sm:$0xf]
    %v313 = vld [vmem:[#allocation7 + $0x22c] sm:$0xf]
    %v314 = vld [vmem:[#allocation7 + $0x230] sm:$0xf]
    %v315 = vld [vmem:[#allocation7 + $0x234] sm:$0xf]
    %v316 = vld [vmem:[#allocation7 + $0x238] sm:$0xf]
    %v317 = vld [vmem:[#allocation7 + $0x23c] sm:$0xf]
    %v318 = vld [vmem:[#allocation7 + $0x240] sm:$0xf]
    %v319 = vld [vmem:[#allocation7 + $0x244] sm:$0xf]
    %v320 = vld [vmem:[#allocation7 + $0x248] sm:$0xf]
    %v321 = vld [vmem:[#allocation7 + $0x24c] sm:$0xf]
    %v322 = vld [vmem:[#allocation7 + $0x250] sm:$0xf]
    %v323 = vld [vmem:[#allocation7 + $0x254] sm:$0xf]
    %v324 = vld [vmem:[#allocation7 + $0x258] sm:$0xf]
    %v325 = vld [vmem:[#allocation7 + $0x25c] sm:$0xf]
    %v326 = vld [vmem:[#allocation7 + $0x260] sm:$0xf]
    %v327 = vld [vmem:[#allocation7 + $0x264] sm:$0xf]
    %v328 = vld [vmem:[#allocation7 + $0x268] sm:$0xf]
    %v329 = vld [vmem:[#allocation7 + $0x26c] sm:$0xf]
    %v330 = vld [vmem:[#allocation7 + $0x270] sm:$0xf]
    %v331 = vld [vmem:[#allocation7 + $0x274] sm:$0xf]
    %v332 = vld [vmem:[#allocation7 + $0x278] sm:$0xf]
    %v333 = vld [vmem:[#allocation7 + $0x27c] sm:$0xf]
    %v334 = vld [vmem:[%s6] ss:$0 sm:$0xff]
    %v495 = vunpack.c.l.b16 %v174
    %v496 = vunpack.c.l.b16 %v175
    %v497 = vunpack.c.l.b16 %v176
    %v498 = vunpack.c.l.b16 %v177
    %v499 = vunpack.c.l.b16 %v178
    %v500 = vunpack.c.l.b16 %v179
    %v501 = vunpack.c.l.b16 %v180
    %v502 = vunpack.c.l.b16 %v181
    %v503 = vunpack.c.l.b16 %v182
    %v504 = vunpack.c.l.b16 %v183
    %v505 = vunpack.c.l.b16 %v184
    %v506 = vunpack.c.l.b16 %v185
    %v507 = vunpack.c.l.b16 %v186
    %v508 = vunpack.c.l.b16 %v187
    %v509 = vunpack.c.l.b16 %v188
    %v510 = vunpack.c.l.b16 %v189
    %v511 = vunpack.c.l.b16 %v190
    %v512 = vunpack.c.l.b16 %v191
    %v513 = vunpack.c.l.b16 %v192
    %v514 = vunpack.c.l.b16 %v193
    %v515 = vunpack.c.l.b16 %v194
    %v516 = vunpack.c.l.b16 %v195
    %v517 = vunpack.c.l.b16 %v196
    %v518 = vunpack.c.l.b16 %v197
    %v519 = vunpack.c.l.b16 %v198
    %v520 = vunpack.c.l.b16 %v199
    %v521 = vunpack.c.l.b16 %v200
    %v522 = vunpack.c.l.b16 %v201
    %v523 = vunpack.c.l.b16 %v202
    %v524 = vunpack.c.l.b16 %v203
    %v525 = vunpack.c.l.b16 %v204
    %v526 = vunpack.c.l.b16 %v205
    %v527 = vunpack.c.l.b16 %v206
    %v528 = vunpack.c.l.b16 %v207
    %v529 = vunpack.c.l.b16 %v208
    %v530 = vunpack.c.l.b16 %v209
    %v531 = vunpack.c.l.b16 %v210
    %v532 = vunpack.c.l.b16 %v211
    %v533 = vunpack.c.l.b16 %v212
    %v534 = vunpack.c.l.b16 %v213
    %v535 = vunpack.c.l.b16 %v214
    %v536 = vunpack.c.l.b16 %v215
    %v537 = vunpack.c.l.b16 %v216
    %v538 = vunpack.c.l.b16 %v217
    %v539 = vunpack.c.l.b16 %v218
    %v540 = vunpack.c.l.b16 %v219
    %v541 = vunpack.c.l.b16 %v220
    %v542 = vunpack.c.l.b16 %v221
    %v543 = vunpack.c.l.b16 %v222
    %v544 = vunpack.c.l.b16 %v223
    %v545 = vunpack.c.l.b16 %v224
    %v546 = vunpack.c.l.b16 %v225
    %v547 = vunpack.c.l.b16 %v226
    %v548 = vunpack.c.l.b16 %v227
    %v549 = vunpack.c.l.b16 %v228
    %v550 = vunpack.c.l.b16 %v229
    %v551 = vunpack.c.l.b16 %v230
    %v552 = vunpack.c.l.b16 %v231
    %v553 = vunpack.c.l.b16 %v232
    %v554 = vunpack.c.l.b16 %v233
    %v555 = vunpack.c.l.b16 %v234
    %v556 = vunpack.c.l.b16 %v235
    %v557 = vunpack.c.l.b16 %v236
    %v558 = vunpack.c.l.b16 %v237
    %v559 = vunpack.c.l.b16 %v238
    %v560 = vunpack.c.l.b16 %v239
    %v561 = vunpack.c.l.b16 %v240
    %v562 = vunpack.c.l.b16 %v241
    %v563 = vunpack.c.l.b16 %v242
    %v564 = vunpack.c.l.b16 %v243
    %v565 = vunpack.c.l.b16 %v244
    %v566 = vunpack.c.l.b16 %v245
    %v567 = vunpack.c.l.b16 %v246
    %v568 = vunpack.c.l.b16 %v247
    %v569 = vunpack.c.l.b16 %v248
    %v570 = vunpack.c.l.b16 %v249
    %v571 = vunpack.c.l.b16 %v250
    %v572 = vunpack.c.l.b16 %v251
    %v573 = vunpack.c.l.b16 %v252
    %v574 = vunpack.c.l.b16 %v253
    %v575 = vunpack.c.l.b16 %v254
    %v576 = vunpack.c.l.b16 %v255
    %v577 = vunpack.c.l.b16 %v256
    %v578 = vunpack.c.l.b16 %v257
    %v579 = vunpack.c.l.b16 %v258
    %v580 = vunpack.c.l.b16 %v259
    %v581 = vunpack.c.l.b16 %v260
    %v582 = vunpack.c.l.b16 %v261
    %v583 = vunpack.c.l.b16 %v262
    %v584 = vunpack.c.l.b16 %v263
    %v585 = vunpack.c.l.b16 %v264
    %v586 = vunpack.c.l.b16 %v265
    %v587 = vunpack.c.l.b16 %v266
    %v588 = vunpack.c.l.b16 %v267
    %v589 = vunpack.c.l.b16 %v268
    %v590 = vunpack.c.l.b16 %v269
    %v591 = vunpack.c.l.b16 %v270
    %v592 = vunpack.c.l.b16 %v271
    %v593 = vunpack.c.l.b16 %v272
    %v594 = vunpack.c.l.b16 %v273
    %v595 = vunpack.c.l.b16 %v274
    %v596 = vunpack.c.l.b16 %v275
    %v597 = vunpack.c.l.b16 %v276
    %v598 = vunpack.c.l.b16 %v277
    %v599 = vunpack.c.l.b16 %v278
    %v600 = vunpack.c.l.b16 %v279
    %v601 = vunpack.c.l.b16 %v280
    %v602 = vunpack.c.l.b16 %v281
    %v603 = vunpack.c.l.b16 %v282
    %v604 = vunpack.c.l.b16 %v283
    %v605 = vunpack.c.l.b16 %v284
    %v606 = vunpack.c.l.b16 %v285
    %v607 = vunpack.c.l.b16 %v286
    %v608 = vunpack.c.l.b16 %v287
    %v609 = vunpack.c.l.b16 %v288
    %v610 = vunpack.c.l.b16 %v289
    %v611 = vunpack.c.l.b16 %v290
    %v612 = vunpack.c.l.b16 %v291
    %v613 = vunpack.c.l.b16 %v292
    %v614 = vunpack.c.l.b16 %v293
    %v615 = vunpack.c.l.b16 %v294
    %v616 = vunpack.c.l.b16 %v295
    %v617 = vunpack.c.l.b16 %v296
    %v618 = vunpack.c.l.b16 %v297
    %v619 = vunpack.c.l.b16 %v298
    %v620 = vunpack.c.l.b16 %v299
    %v621 = vunpack.c.l.b16 %v300
    %v622 = vunpack.c.l.b16 %v301
    %v623 = vunpack.c.l.b16 %v302
    %v624 = vunpack.c.l.b16 %v303
    %v625 = vunpack.c.l.b16 %v304
    %v626 = vunpack.c.l.b16 %v305
    %v627 = vunpack.c.l.b16 %v306
    %v628 = vunpack.c.l.b16 %v307
    %v629 = vunpack.c.l.b16 %v308
    %v630 = vunpack.c.l.b16 %v309
    %v631 = vunpack.c.l.b16 %v310
    %v632 = vunpack.c.l.b16 %v311
    %v633 = vunpack.c.l.b16 %v312
    %v634 = vunpack.c.l.b16 %v313
    %v635 = vunpack.c.l.b16 %v314
    %v636 = vunpack.c.l.b16 %v315
    %v637 = vunpack.c.l.b16 %v316
    %v638 = vunpack.c.l.b16 %v317
    %v639 = vunpack.c.l.b16 %v318
    %v640 = vunpack.c.l.b16 %v319
    %v641 = vunpack.c.l.b16 %v320
    %v642 = vunpack.c.l.b16 %v321
    %v643 = vunpack.c.l.b16 %v322
    %v644 = vunpack.c.l.b16 %v323
    %v645 = vunpack.c.l.b16 %v324
    %v646 = vunpack.c.l.b16 %v325
    %v647 = vunpack.c.l.b16 %v326
    %v648 = vunpack.c.l.b16 %v327
    %v649 = vunpack.c.l.b16 %v328
    %v650 = vunpack.c.l.b16 %v329
    %v651 = vunpack.c.l.b16 %v330
    %v652 = vunpack.c.l.b16 %v331
    %v653 = vunpack.c.l.b16 %v332
    %v654 = vunpack.c.l.b16 %v333
    %v655 = vpack.c.b16 %v496, %v495
    %v656 = vpack.c.b16 %v498, %v497
    %v657 = vpack.c.b16 %v500, %v499
    %v658 = vpack.c.b16 %v502, %v501
    %v659 = vpack.c.b16 %v504, %v503
    %v660 = vpack.c.b16 %v506, %v505
    %v661 = vpack.c.b16 %v508, %v507
    %v662 = vpack.c.b16 %v510, %v509
    %v663 = vpack.c.b16 %v512, %v511
    %v664 = vpack.c.b16 %v514, %v513
    %v665 = vpack.c.b16 %v516, %v515
    %v666 = vpack.c.b16 %v518, %v517
    %v667 = vpack.c.b16 %v520, %v519
    %v668 = vpack.c.b16 %v522, %v521
    %v669 = vpack.c.b16 %v524, %v523
    %v670 = vpack.c.b16 %v526, %v525
    %v671 = vpack.c.b16 %v528, %v527
    %v672 = vpack.c.b16 %v530, %v529
    %v673 = vpack.c.b16 %v532, %v531
    %v674 = vpack.c.b16 %v534, %v533
    %v675 = vpack.c.b16 %v536, %v535
    %v676 = vpack.c.b16 %v538, %v537
    %v677 = vpack.c.b16 %v540, %v539
    %v678 = vpack.c.b16 %v542, %v541
    %v679 = vpack.c.b16 %v544, %v543
    %v680 = vpack.c.b16 %v546, %v545
    %v681 = vpack.c.b16 %v548, %v547
    %v682 = vpack.c.b16 %v550, %v549
    %v683 = vpack.c.b16 %v552, %v551
    %v684 = vpack.c.b16 %v554, %v553
    %v685 = vpack.c.b16 %v556, %v555
    %v686 = vpack.c.b16 %v558, %v557
    %v687 = vpack.c.b16 %v560, %v559
    %v688 = vpack.c.b16 %v562, %v561
    %v689 = vpack.c.b16 %v564, %v563
    %v690 = vpack.c.b16 %v566, %v565
    %v691 = vpack.c.b16 %v568, %v567
    %v692 = vpack.c.b16 %v570, %v569
    %v693 = vpack.c.b16 %v572, %v571
    %v694 = vpack.c.b16 %v574, %v573
    %v695 = vpack.c.b16 %v576, %v575
    %v696 = vpack.c.b16 %v578, %v577
    %v697 = vpack.c.b16 %v580, %v579
    %v698 = vpack.c.b16 %v582, %v581
    %v699 = vpack.c.b16 %v584, %v583
    %v700 = vpack.c.b16 %v586, %v585
    %v701 = vpack.c.b16 %v588, %v587
    %v702 = vpack.c.b16 %v590, %v589
    %v703 = vpack.c.b16 %v592, %v591
    %v704 = vpack.c.b16 %v594, %v593
    %v705 = vpack.c.b16 %v596, %v595
    %v706 = vpack.c.b16 %v598, %v597
    %v707 = vpack.c.b16 %v600, %v599
    %v708 = vpack.c.b16 %v602, %v601
    %v709 = vpack.c.b16 %v604, %v603
    %v710 = vpack.c.b16 %v606, %v605
    %v711 = vpack.c.b16 %v608, %v607
    %v712 = vpack.c.b16 %v610, %v609
    %v713 = vpack.c.b16 %v612, %v611
    %v714 = vpack.c.b16 %v614, %v613
    %v715 = vpack.c.b16 %v616, %v615
    %v716 = vpack.c.b16 %v618, %v617
    %v717 = vpack.c.b16 %v620, %v619
    %v718 = vpack.c.b16 %v622, %v621
    %v719 = vpack.c.b16 %v624, %v623
    %v720 = vpack.c.b16 %v626, %v625
    %v721 = vpack.c.b16 %v628, %v627
    %v722 = vpack.c.b16 %v630, %v629
    %v723 = vpack.c.b16 %v632, %v631
    %v724 = vpack.c.b16 %v634, %v633
    %v725 = vpack.c.b16 %v636, %v635
    %v726 = vpack.c.b16 %v638, %v637
    %v727 = vpack.c.b16 %v640, %v639
    %v728 = vpack.c.b16 %v642, %v641
    %v729 = vpack.c.b16 %v644, %v643
    %v730 = vpack.c.b16 %v646, %v645
    %v731 = vpack.c.b16 %v648, %v647
    %v732 = vpack.c.b16 %v650, %v649
    %v733 = vpack.c.b16 %v652, %v651
    %v734 = vpack.c.b16 %v654, %v653
    %815 = vmatprep.subr.bf16.mxu0 0
    %816 = vmatpush1.bf16.msra.mxu0 %v655
    %817 = vmatprep.subr.bf16.mxu0 0
    %818 = vmatpush1.bf16.msra.mxu0 %v656
    %819 = vmatprep.subr.bf16.mxu0 0
    %820 = vmatpush1.bf16.msra.mxu0 %v657
    %821 = vmatprep.subr.bf16.mxu0 0
    %822 = vmatpush1.bf16.msra.mxu0 %v658
    %823 = vmatprep.subr.bf16.mxu0 0
    %824 = vmatpush1.bf16.msra.mxu0 %v659
    %825 = vmatprep.subr.bf16.mxu0 0
    %826 = vmatpush1.bf16.msra.mxu0 %v660
    %827 = vmatprep.subr.bf16.mxu0 0
    %828 = vmatpush1.bf16.msra.mxu0 %v661
    %829 = vmatprep.subr.bf16.mxu0 0
    %830 = vmatpush1.bf16.msra.mxu0 %v662
    %831 = vmatprep.subr.bf16.mxu0 0
    %832 = vmatpush1.bf16.msra.mxu0 %v663
    %833 = vmatprep.subr.bf16.mxu0 0
    %834 = vmatpush1.bf16.msra.mxu0 %v664
    %835 = vmatprep.subr.bf16.mxu0 0
    %836 = vmatpush1.bf16.msra.mxu0 %v665
    %837 = vmatprep.subr.bf16.mxu0 0
    %838 = vmatpush1.bf16.msra.mxu0 %v666
    %839 = vmatprep.subr.bf16.mxu0 0
    %840 = vmatpush1.bf16.msra.mxu0 %v667
    %841 = vmatprep.subr.bf16.mxu0 0
    %842 = vmatpush1.bf16.msra.mxu0 %v668
    %843 = vmatprep.subr.bf16.mxu0 0
    %844 = vmatpush1.bf16.msra.mxu0 %v669
    %845 = vmatprep.subr.bf16.mxu0 0
    %846 = vmatpush1.bf16.msra.mxu0 %v670
    %847 = vmatprep.mubr.bf16.mxu0 %v165
    %848 = vmatmul.mubr.bf16.gmra.mrb[0].mxu0 %v164
    %v849 = vpop.f32.mrb[0].mxu0
    %v850 = vadd.f32 %v334, %v849
    %v851 = vpop.f32.mrb[0].mxu0
    %v852 = vpop.f32.mrb[0].mxu0
    %v853 = vpop.f32.mrb[0].mxu0
    %854 = vdwg.mxu0
    %855 = vmatprep.subr.bf16.mxu0 0
    %856 = vmatpush1.bf16.msra.mxu0 %v671
    %857 = vmatprep.subr.bf16.mxu0 0
    %858 = vmatpush1.bf16.msra.mxu0 %v672
    %859 = vmatprep.subr.bf16.mxu0 0
    %860 = vmatpush1.bf16.msra.mxu0 %v673
    %861 = vmatprep.subr.bf16.mxu0 0
    %862 = vmatpush1.bf16.msra.mxu0 %v674
    %863 = vmatprep.subr.bf16.mxu0 0
    %864 = vmatpush1.bf16.msra.mxu0 %v675
    %865 = vmatprep.subr.bf16.mxu0 0
    %866 = vmatpush1.bf16.msra.mxu0 %v676
    %867 = vmatprep.subr.bf16.mxu0 0
    %868 = vmatpush1.bf16.msra.mxu0 %v677
    %869 = vmatprep.subr.bf16.mxu0 0
    %870 = vmatpush1.bf16.msra.mxu0 %v678
    %871 = vmatprep.subr.bf16.mxu0 0
    %872 = vmatpush1.bf16.msra.mxu0 %v679
    %873 = vmatprep.subr.bf16.mxu0 0
    %874 = vmatpush1.bf16.msra.mxu0 %v680
    %875 = vmatprep.subr.bf16.mxu0 0
    %876 = vmatpush1.bf16.msra.mxu0 %v681
    %877 = vmatprep.subr.bf16.mxu0 0
    %878 = vmatpush1.bf16.msra.mxu0 %v682
    %879 = vmatprep.subr.bf16.mxu0 0
    %880 = vmatpush1.bf16.msra.mxu0 %v683
    %881 = vmatprep.subr.bf16.mxu0 0
    %882 = vmatpush1.bf16.msra.mxu0 %v684
    %883 = vmatprep.subr.bf16.mxu0 0
    %884 = vmatpush1.bf16.msra.mxu0 %v685
    %885 = vmatprep.subr.bf16.mxu0 0
    %886 = vmatpush1.bf16.msra.mxu0 %v686
    %887 = vmatprep.mubr.bf16.mxu0 %v167
    %888 = vmatmul.mubr.bf16.gmra.mrb[0].mxu0 %v166
    %v889 = vpop.f32.mrb[0].mxu0
    %v890 = vadd.f32 %v850, %v889
    %v891 = vpop.f32.mrb[0].mxu0
    %v892 = vpop.f32.mrb[0].mxu0
    %v893 = vpop.f32.mrb[0].mxu0
    %894 = vdwg.mxu0
    %895 = vmatprep.subr.bf16.mxu0 0
    %896 = vmatpush1.bf16.msra.mxu0 %v687
    %897 = vmatprep.subr.bf16.mxu0 0
    %898 = vmatpush1.bf16.msra.mxu0 %v688
    %899 = vmatprep.subr.bf16.mxu0 0
    %900 = vmatpush1.bf16.msra.mxu0 %v689
    %901 = vmatprep.subr.bf16.mxu0 0
    %902 = vmatpush1.bf16.msra.mxu0 %v690
    %903 = vmatprep.subr.bf16.mxu0 0
    %904 = vmatpush1.bf16.msra.mxu0 %v691
    %905 = vmatprep.subr.bf16.mxu0 0
    %906 = vmatpush1.bf16.msra.mxu0 %v692
    %907 = vmatprep.subr.bf16.mxu0 0
    %908 = vmatpush1.bf16.msra.mxu0 %v693
    %909 = vmatprep.subr.bf16.mxu0 0
    %910 = vmatpush1.bf16.msra.mxu0 %v694
    %911 = vmatprep.subr.bf16.mxu0 0
    %912 = vmatpush1.bf16.msra.mxu0 %v695
    %913 = vmatprep.subr.bf16.mxu0 0
    %914 = vmatpush1.bf16.msra.mxu0 %v696
    %915 = vmatprep.subr.bf16.mxu0 0
    %916 = vmatpush1.bf16.msra.mxu0 %v697
    %917 = vmatprep.subr.bf16.mxu0 0
    %918 = vmatpush1.bf16.msra.mxu0 %v698
    %919 = vmatprep.subr.bf16.mxu0 0
    %920 = vmatpush1.bf16.msra.mxu0 %v699
    %921 = vmatprep.subr.bf16.mxu0 0
    %922 = vmatpush1.bf16.msra.mxu0 %v700
    %923 = vmatprep.subr.bf16.mxu0 0
    %924 = vmatpush1.bf16.msra.mxu0 %v701
    %925 = vmatprep.subr.bf16.mxu0 0
    %926 = vmatpush1.bf16.msra.mxu0 %v702
    %927 = vmatprep.mubr.bf16.mxu0 %v169
    %928 = vmatmul.mubr.bf16.gmra.mrb[0].mxu0 %v168
    %v929 = vpop.f32.mrb[0].mxu0
    %v930 = vadd.f32 %v890, %v929
    %v931 = vpop.f32.mrb[0].mxu0
    %v932 = vpop.f32.mrb[0].mxu0
    %v933 = vpop.f32.mrb[0].mxu0
    %934 = vdwg.mxu0
    %935 = vmatprep.subr.bf16.mxu0 0
    %936 = vmatpush1.bf16.msra.mxu0 %v703
    %937 = vmatprep.subr.bf16.mxu0 0
    %938 = vmatpush1.bf16.msra.mxu0 %v704
    %939 = vmatprep.subr.bf16.mxu0 0
    %940 = vmatpush1.bf16.msra.mxu0 %v705
    %941 = vmatprep.subr.bf16.mxu0 0
    %942 = vmatpush1.bf16.msra.mxu0 %v706
    %943 = vmatprep.subr.bf16.mxu0 0
    %944 = vmatpush1.bf16.msra.mxu0 %v707
    %945 = vmatprep.subr.bf16.mxu0 0
    %946 = vmatpush1.bf16.msra.mxu0 %v708
    %947 = vmatprep.subr.bf16.mxu0 0
    %948 = vmatpush1.bf16.msra.mxu0 %v709
    %949 = vmatprep.subr.bf16.mxu0 0
    %950 = vmatpush1.bf16.msra.mxu0 %v710
    %951 = vmatprep.subr.bf16.mxu0 0
    %952 = vmatpush1.bf16.msra.mxu0 %v711
    %953 = vmatprep.subr.bf16.mxu0 0
    %954 = vmatpush1.bf16.msra.mxu0 %v712
    %955 = vmatprep.subr.bf16.mxu0 0
    %956 = vmatpush1.bf16.msra.mxu0 %v713
    %957 = vmatprep.subr.bf16.mxu0 0
    %958 = vmatpush1.bf16.msra.mxu0 %v714
    %959 = vmatprep.subr.bf16.mxu0 0
    %960 = vmatpush1.bf16.msra.mxu0 %v715
    %961 = vmatprep.subr.bf16.mxu0 0
    %962 = vmatpush1.bf16.msra.mxu0 %v716
    %963 = vmatprep.subr.bf16.mxu0 0
    %964 = vmatpush1.bf16.msra.mxu0 %v717
    %965 = vmatprep.subr.bf16.mxu0 0
    %966 = vmatpush1.bf16.msra.mxu0 %v718
    %967 = vmatprep.mubr.bf16.mxu0 %v171
    %968 = vmatmul.mubr.bf16.gmra.mrb[0].mxu0 %v170
    %v969 = vpop.f32.mrb[0].mxu0
    %v970 = vadd.f32 %v930, %v969
    %v971 = vpop.f32.mrb[0].mxu0
    %v972 = vpop.f32.mrb[0].mxu0
    %v973 = vpop.f32.mrb[0].mxu0
    %974 = vdwg.mxu0
    %975 = vmatprep.subr.bf16.mxu0 0
    %976 = vmatpush1.bf16.msra.mxu0 %v719
    %977 = vmatprep.subr.bf16.mxu0 0
    %978 = vmatpush1.bf16.msra.mxu0 %v720
    %979 = vmatprep.subr.bf16.mxu0 0
    %980 = vmatpush1.bf16.msra.mxu0 %v721
    %981 = vmatprep.subr.bf16.mxu0 0
    %982 = vmatpush1.bf16.msra.mxu0 %v722
    %983 = vmatprep.subr.bf16.mxu0 0
    %984 = vmatpush1.bf16.msra.mxu0 %v723
    %985 = vmatprep.subr.bf16.mxu0 0
    %986 = vmatpush1.bf16.msra.mxu0 %v724
    %987 = vmatprep.subr.bf16.mxu0 0
    %988 = vmatpush1.bf16.msra.mxu0 %v725
    %989 = vmatprep.subr.bf16.mxu0 0
    %990 = vmatpush1.bf16.msra.mxu0 %v726
    %991 = vmatprep.subr.bf16.mxu0 0
    %992 = vmatpush1.bf16.msra.mxu0 %v727
    %993 = vmatprep.subr.bf16.mxu0 0
    %994 = vmatpush1.bf16.msra.mxu0 %v728
    %995 = vmatprep.subr.bf16.mxu0 0
    %996 = vmatpush1.bf16.msra.mxu0 %v729
    %997 = vmatprep.subr.bf16.mxu0 0
    %998 = vmatpush1.bf16.msra.mxu0 %v730
    %999 = vmatprep.subr.bf16.mxu0 0
    %1000 = vmatpush1.bf16.msra.mxu0 %v731
    %1001 = vmatprep.subr.bf16.mxu0 0
    %1002 = vmatpush1.bf16.msra.mxu0 %v732
    %1003 = vmatprep.subr.bf16.mxu0 0
    %1004 = vmatpush1.bf16.msra.mxu0 %v733
    %1005 = vmatprep.subr.bf16.mxu0 0
    %1006 = vmatpush1.bf16.msra.mxu0 %v734
    %1007 = vmatprep.mubr.bf16.mxu0 %v173
    %1008 = vmatmul.mubr.bf16.gmra.mrb[0].mxu0 %v172
    %v1009 = vpop.f32.mrb[0].mxu0
    %v1010 = vadd.f32 %v970, %v1009
    %v1011 = vpop.f32.mrb[0].mxu0
    %v1012 = vpop.f32.mrb[0].mxu0
    %v1013 = vpop.f32.mrb[0].mxu0
    %1014 = vdwg.mxu0
    %v1015 = vmax.f32 %v1010, 0.0
    %v1016 = vld [vmem:[#allocation5] sm:$0xff]
    %v1017 = vld [vmem:[#allocation5 + $0x8] sm:$0xf]
    %v1020 = vcombine.high %v1016, %v1016
    %v1022 = vunpack.c.l.s4 1983009808
    %v1023 = vunpack.c.0.s8 %v1022
    %v1024 = vlaneseq
    %v1025 = vshrl.u32 %v1024, 7
    %v1026 = vsub.s32 %v1023, %v1025
    %v1027 = vrot.slane %v1016, %v1026
    %v1029 = vunpack.c.l.s4 1983009808
    %v1030 = vunpack.c.0.s8 %v1029
    %v1031 = vlaneseq
    %v1032 = vshrl.u32 %v1031, 7
    %v1033 = vsub.s32 %v1030, %v1032
    %v1034 = vrot.slane %v1020, %v1033
    %v1035 = vcombine.high %v1027, %v1027
    %v1036 = vcombine.high %v1034, %v1034
    %v1038 = vunpack.c.l.s4 1983009808
    %v1039 = vunpack.c.0.s8 %v1038
    %v1040 = vlaneseq
    %v1041 = vshrl.u32 %v1040, 7
    %v1042 = vsub.s32 %v1039, %v1041
    %v1043 = vrot.slane %v1017, %v1042
    %v1044 = vcombine.high %v1043, %v1043
    %v1051 = vpack.c.bf16 %v1027, %v1027
    %v1052 = vpack.c.bf16 %v1035, %v1035
    %v1053 = vpack.c.bf16 %v1034, %v1034
    %v1054 = vpack.c.bf16 %v1036, %v1036
    %v1055 = vpack.c.bf16 %v1043, %v1043
    %v1056 = vpack.c.bf16 %v1044, %v1044
    %v1057 = vld [vmem:[#allocation8] sm:$0xf]
    %v1058 = vld [vmem:[#allocation8 + $0x4] sm:$0xf]
    %v1059 = vld [vmem:[#allocation8 + $0x8] sm:$0xf]
    %v1060 = vld [vmem:[#allocation8 + $0xc] sm:$0xf]
    %v1061 = vld [vmem:[#allocation8 + $0x10] sm:$0xf]
    %v1062 = vld [vmem:[#allocation8 + $0x14] sm:$0xf]
    %v1063 = vld [vmem:[#allocation8 + $0x18] sm:$0xf]
    %v1064 = vld [vmem:[#allocation8 + $0x1c] sm:$0xf]
    %v1065 = vld [vmem:[#allocation8 + $0x20] sm:$0xf]
    %v1066 = vld [vmem:[#allocation8 + $0x24] sm:$0xf]
    %v1067 = vld [vmem:[#allocation8 + $0x28] sm:$0xf]
    %v1068 = vld [vmem:[#allocation8 + $0x2c] sm:$0xf]
    %v1069 = vld [vmem:[#allocation8 + $0x30] sm:$0xf]
    %v1070 = vld [vmem:[#allocation8 + $0x34] sm:$0xf]
    %v1071 = vld [vmem:[#allocation8 + $0x38] sm:$0xf]
    %v1072 = vld [vmem:[#allocation8 + $0x3c] sm:$0xf]
    %v1073 = vld [vmem:[#allocation8 + $0x40] sm:$0xf]
    %v1074 = vld [vmem:[#allocation8 + $0x44] sm:$0xf]
    %v1075 = vld [vmem:[#allocation8 + $0x48] sm:$0xf]
    %v1076 = vld [vmem:[#allocation8 + $0x4c] sm:$0xf]
    %v1077 = vld [vmem:[#allocation8 + $0x50] sm:$0xf]
    %v1078 = vld [vmem:[#allocation8 + $0x54] sm:$0xf]
    %v1079 = vld [vmem:[#allocation8 + $0x58] sm:$0xf]
    %v1080 = vld [vmem:[#allocation8 + $0x5c] sm:$0xf]
    %v1081 = vld [vmem:[#allocation8 + $0x60] sm:$0xf]
    %v1082 = vld [vmem:[#allocation8 + $0x64] sm:$0xf]
    %v1083 = vld [vmem:[#allocation8 + $0x68] sm:$0xf]
    %v1084 = vld [vmem:[#allocation8 + $0x6c] sm:$0xf]
    %v1085 = vld [vmem:[#allocation8 + $0x70] sm:$0xf]
    %v1086 = vld [vmem:[#allocation8 + $0x74] sm:$0xf]
    %v1087 = vld [vmem:[#allocation8 + $0x78] sm:$0xf]
    %v1088 = vld [vmem:[#allocation8 + $0x7c] sm:$0xf]
    %v1089 = vld [vmem:[#allocation8 + $0x80] sm:$0xf]
    %v1090 = vld [vmem:[#allocation8 + $0x84] sm:$0xf]
    %v1091 = vld [vmem:[#allocation8 + $0x88] sm:$0xf]
    %v1092 = vld [vmem:[#allocation8 + $0x8c] sm:$0xf]
    %v1093 = vld [vmem:[#allocation8 + $0x90] sm:$0xf]
    %v1094 = vld [vmem:[#allocation8 + $0x94] sm:$0xf]
    %v1095 = vld [vmem:[#allocation8 + $0x98] sm:$0xf]
    %v1096 = vld [vmem:[#allocation8 + $0x9c] sm:$0xf]
    %v1097 = vld [vmem:[#allocation8 + $0xa0] sm:$0xf]
    %v1098 = vld [vmem:[#allocation8 + $0xa4] sm:$0xf]
    %v1099 = vld [vmem:[#allocation8 + $0xa8] sm:$0xf]
    %v1100 = vld [vmem:[#allocation8 + $0xac] sm:$0xf]
    %v1101 = vld [vmem:[#allocation8 + $0xb0] sm:$0xf]
    %v1102 = vld [vmem:[#allocation8 + $0xb4] sm:$0xf]
    %v1103 = vld [vmem:[#allocation8 + $0xb8] sm:$0xf]
    %v1104 = vld [vmem:[#allocation8 + $0xbc] sm:$0xf]
    %v1105 = vld [vmem:[#allocation8 + $0xc0] sm:$0xf]
    %v1106 = vld [vmem:[#allocation8 + $0xc4] sm:$0xf]
    %v1107 = vld [vmem:[#allocation8 + $0xc8] sm:$0xf]
    %v1108 = vld [vmem:[#allocation8 + $0xcc] sm:$0xf]
    %v1109 = vld [vmem:[#allocation8 + $0xd0] sm:$0xf]
    %v1110 = vld [vmem:[#allocation8 + $0xd4] sm:$0xf]
    %v1111 = vld [vmem:[#allocation8 + $0xd8] sm:$0xf]
    %v1112 = vld [vmem:[#allocation8 + $0xdc] sm:$0xf]
    %v1113 = vld [vmem:[#allocation8 + $0xe0] sm:$0xf]
    %v1114 = vld [vmem:[#allocation8 + $0xe4] sm:$0xf]
    %v1115 = vld [vmem:[#allocation8 + $0xe8] sm:$0xf]
    %v1116 = vld [vmem:[#allocation8 + $0xec] sm:$0xf]
    %v1117 = vld [vmem:[#allocation8 + $0xf0] sm:$0xf]
    %v1118 = vld [vmem:[#allocation8 + $0xf4] sm:$0xf]
    %v1119 = vld [vmem:[#allocation8 + $0xf8] sm:$0xf]
    %v1120 = vld [vmem:[#allocation8 + $0xfc] sm:$0xf]
    %v1121 = vld [vmem:[#allocation8 + $0x100] sm:$0xf]
    %v1122 = vld [vmem:[#allocation8 + $0x104] sm:$0xf]
    %v1123 = vld [vmem:[#allocation8 + $0x108] sm:$0xf]
    %v1124 = vld [vmem:[#allocation8 + $0x10c] sm:$0xf]
    %v1125 = vld [vmem:[#allocation8 + $0x110] sm:$0xf]
    %v1126 = vld [vmem:[#allocation8 + $0x114] sm:$0xf]
    %v1127 = vld [vmem:[#allocation8 + $0x118] sm:$0xf]
    %v1128 = vld [vmem:[#allocation8 + $0x11c] sm:$0xf]
    %v1129 = vld [vmem:[#allocation8 + $0x120] sm:$0xf]
    %v1130 = vld [vmem:[#allocation8 + $0x124] sm:$0xf]
    %v1131 = vld [vmem:[#allocation8 + $0x128] sm:$0xf]
    %v1132 = vld [vmem:[#allocation8 + $0x12c] sm:$0xf]
    %v1133 = vld [vmem:[#allocation8 + $0x130] sm:$0xf]
    %v1134 = vld [vmem:[#allocation8 + $0x134] sm:$0xf]
    %v1135 = vld [vmem:[#allocation8 + $0x138] sm:$0xf]
    %v1136 = vld [vmem:[#allocation8 + $0x13c] sm:$0xf]
    %v1137 = vld [vmem:[#allocation8 + $0x140] sm:$0xf]
    %v1138 = vld [vmem:[#allocation8 + $0x144] sm:$0xf]
    %v1139 = vld [vmem:[#allocation8 + $0x148] sm:$0xf]
    %v1140 = vld [vmem:[#allocation8 + $0x14c] sm:$0xf]
    %v1141 = vld [vmem:[#allocation8 + $0x150] sm:$0xf]
    %v1142 = vld [vmem:[#allocation8 + $0x154] sm:$0xf]
    %v1143 = vld [vmem:[#allocation8 + $0x158] sm:$0xf]
    %v1144 = vld [vmem:[#allocation8 + $0x15c] sm:$0xf]
    %v1145 = vld [vmem:[#allocation8 + $0x160] sm:$0xf]
    %v1146 = vld [vmem:[#allocation8 + $0x164] sm:$0xf]
    %v1147 = vld [vmem:[#allocation8 + $0x168] sm:$0xf]
    %v1148 = vld [vmem:[#allocation8 + $0x16c] sm:$0xf]
    %v1149 = vld [vmem:[#allocation8 + $0x170] sm:$0xf]
    %v1150 = vld [vmem:[#allocation8 + $0x174] sm:$0xf]
    %v1151 = vld [vmem:[#allocation8 + $0x178] sm:$0xf]
    %v1152 = vld [vmem:[#allocation8 + $0x17c] sm:$0xf]
    %v1153 = vld [vmem:[%s6 + $0x1] ss:$0 sm:$0xff]
    %v1250 = vunpack.c.l.b16 %v1057
    %v1251 = vunpack.c.l.b16 %v1058
    %v1252 = vunpack.c.l.b16 %v1059
    %v1253 = vunpack.c.l.b16 %v1060
    %v1254 = vunpack.c.l.b16 %v1061
    %v1255 = vunpack.c.l.b16 %v1062
    %v1256 = vunpack.c.l.b16 %v1063
    %v1257 = vunpack.c.l.b16 %v1064
    %v1258 = vunpack.c.l.b16 %v1065
    %v1259 = vunpack.c.l.b16 %v1066
    %v1260 = vunpack.c.l.b16 %v1067
    %v1261 = vunpack.c.l.b16 %v1068
    %v1262 = vunpack.c.l.b16 %v1069
    %v1263 = vunpack.c.l.b16 %v1070
    %v1264 = vunpack.c.l.b16 %v1071
    %v1265 = vunpack.c.l.b16 %v1072
    %v1266 = vunpack.c.l.b16 %v1073
    %v1267 = vunpack.c.l.b16 %v1074
    %v1268 = vunpack.c.l.b16 %v1075
    %v1269 = vunpack.c.l.b16 %v1076
    %v1270 = vunpack.c.l.b16 %v1077
    %v1271 = vunpack.c.l.b16 %v1078
    %v1272 = vunpack.c.l.b16 %v1079
    %v1273 = vunpack.c.l.b16 %v1080
    %v1274 = vunpack.c.l.b16 %v1081
    %v1275 = vunpack.c.l.b16 %v1082
    %v1276 = vunpack.c.l.b16 %v1083
    %v1277 = vunpack.c.l.b16 %v1084
    %v1278 = vunpack.c.l.b16 %v1085
    %v1279 = vunpack.c.l.b16 %v1086
    %v1280 = vunpack.c.l.b16 %v1087
    %v1281 = vunpack.c.l.b16 %v1088
    %v1282 = vunpack.c.l.b16 %v1089
    %v1283 = vunpack.c.l.b16 %v1090
    %v1284 = vunpack.c.l.b16 %v1091
    %v1285 = vunpack.c.l.b16 %v1092
    %v1286 = vunpack.c.l.b16 %v1093
    %v1287 = vunpack.c.l.b16 %v1094
    %v1288 = vunpack.c.l.b16 %v1095
    %v1289 = vunpack.c.l.b16 %v1096
    %v1290 = vunpack.c.l.b16 %v1097
    %v1291 = vunpack.c.l.b16 %v1098
    %v1292 = vunpack.c.l.b16 %v1099
    %v1293 = vunpack.c.l.b16 %v1100
    %v1294 = vunpack.c.l.b16 %v1101
    %v1295 = vunpack.c.l.b16 %v1102
    %v1296 = vunpack.c.l.b16 %v1103
    %v1297 = vunpack.c.l.b16 %v1104
    %v1298 = vunpack.c.l.b16 %v1105
    %v1299 = vunpack.c.l.b16 %v1106
    %v1300 = vunpack.c.l.b16 %v1107
    %v1301 = vunpack.c.l.b16 %v1108
    %v1302 = vunpack.c.l.b16 %v1109
    %v1303 = vunpack.c.l.b16 %v1110
    %v1304 = vunpack.c.l.b16 %v1111
    %v1305 = vunpack.c.l.b16 %v1112
    %v1306 = vunpack.c.l.b16 %v1113
    %v1307 = vunpack.c.l.b16 %v1114
    %v1308 = vunpack.c.l.b16 %v1115
    %v1309 = vunpack.c.l.b16 %v1116
    %v1310 = vunpack.c.l.b16 %v1117
    %v1311 = vunpack.c.l.b16 %v1118
    %v1312 = vunpack.c.l.b16 %v1119
    %v1313 = vunpack.c.l.b16 %v1120
    %v1314 = vunpack.c.l.b16 %v1121
    %v1315 = vunpack.c.l.b16 %v1122
    %v1316 = vunpack.c.l.b16 %v1123
    %v1317 = vunpack.c.l.b16 %v1124
    %v1318 = vunpack.c.l.b16 %v1125
    %v1319 = vunpack.c.l.b16 %v1126
    %v1320 = vunpack.c.l.b16 %v1127
    %v1321 = vunpack.c.l.b16 %v1128
    %v1322 = vunpack.c.l.b16 %v1129
    %v1323 = vunpack.c.l.b16 %v1130
    %v1324 = vunpack.c.l.b16 %v1131
    %v1325 = vunpack.c.l.b16 %v1132
    %v1326 = vunpack.c.l.b16 %v1133
    %v1327 = vunpack.c.l.b16 %v1134
    %v1328 = vunpack.c.l.b16 %v1135
    %v1329 = vunpack.c.l.b16 %v1136
    %v1330 = vunpack.c.l.b16 %v1137
    %v1331 = vunpack.c.l.b16 %v1138
    %v1332 = vunpack.c.l.b16 %v1139
    %v1333 = vunpack.c.l.b16 %v1140
    %v1334 = vunpack.c.l.b16 %v1141
    %v1335 = vunpack.c.l.b16 %v1142
    %v1336 = vunpack.c.l.b16 %v1143
    %v1337 = vunpack.c.l.b16 %v1144
    %v1338 = vunpack.c.l.b16 %v1145
    %v1339 = vunpack.c.l.b16 %v1146
    %v1340 = vunpack.c.l.b16 %v1147
    %v1341 = vunpack.c.l.b16 %v1148
    %v1342 = vunpack.c.l.b16 %v1149
    %v1343 = vunpack.c.l.b16 %v1150
    %v1344 = vunpack.c.l.b16 %v1151
    %v1345 = vunpack.c.l.b16 %v1152
    %v1346 = vpack.c.b16 %v1251, %v1250
    %v1347 = vpack.c.b16 %v1253, %v1252
    %v1348 = vpack.c.b16 %v1255, %v1254
    %v1349 = vpack.c.b16 %v1257, %v1256
    %v1350 = vpack.c.b16 %v1259, %v1258
    %v1351 = vpack.c.b16 %v1261, %v1260
    %v1352 = vpack.c.b16 %v1263, %v1262
    %v1353 = vpack.c.b16 %v1265, %v1264
    %v1354 = vpack.c.b16 %v1267, %v1266
    %v1355 = vpack.c.b16 %v1269, %v1268
    %v1356 = vpack.c.b16 %v1271, %v1270
    %v1357 = vpack.c.b16 %v1273, %v1272
    %v1358 = vpack.c.b16 %v1275, %v1274
    %v1359 = vpack.c.b16 %v1277, %v1276
    %v1360 = vpack.c.b16 %v1279, %v1278
    %v1361 = vpack.c.b16 %v1281, %v1280
    %v1362 = vpack.c.b16 %v1283, %v1282
    %v1363 = vpack.c.b16 %v1285, %v1284
    %v1364 = vpack.c.b16 %v1287, %v1286
    %v1365 = vpack.c.b16 %v1289, %v1288
    %v1366 = vpack.c.b16 %v1291, %v1290
    %v1367 = vpack.c.b16 %v1293, %v1292
    %v1368 = vpack.c.b16 %v1295, %v1294
    %v1369 = vpack.c.b16 %v1297, %v1296
    %v1370 = vpack.c.b16 %v1299, %v1298
    %v1371 = vpack.c.b16 %v1301, %v1300
    %v1372 = vpack.c.b16 %v1303, %v1302
    %v1373 = vpack.c.b16 %v1305, %v1304
    %v1374 = vpack.c.b16 %v1307, %v1306
    %v1375 = vpack.c.b16 %v1309, %v1308
    %v1376 = vpack.c.b16 %v1311, %v1310
    %v1377 = vpack.c.b16 %v1313, %v1312
    %v1378 = vpack.c.b16 %v1315, %v1314
    %v1379 = vpack.c.b16 %v1317, %v1316
    %v1380 = vpack.c.b16 %v1319, %v1318
    %v1381 = vpack.c.b16 %v1321, %v1320
    %v1382 = vpack.c.b16 %v1323, %v1322
    %v1383 = vpack.c.b16 %v1325, %v1324
    %v1384 = vpack.c.b16 %v1327, %v1326
    %v1385 = vpack.c.b16 %v1329, %v1328
    %v1386 = vpack.c.b16 %v1331, %v1330
    %v1387 = vpack.c.b16 %v1333, %v1332
    %v1388 = vpack.c.b16 %v1335, %v1334
    %v1389 = vpack.c.b16 %v1337, %v1336
    %v1390 = vpack.c.b16 %v1339, %v1338
    %v1391 = vpack.c.b16 %v1341, %v1340
    %v1392 = vpack.c.b16 %v1343, %v1342
    %v1393 = vpack.c.b16 %v1345, %v1344
    %1442 = vmatprep.subr.bf16.mxu0 0
    %1443 = vmatpush1.bf16.msra.mxu0 %v1346
    %1444 = vmatprep.subr.bf16.mxu0 0
    %1445 = vmatpush1.bf16.msra.mxu0 %v1347
    %1446 = vmatprep.subr.bf16.mxu0 0
    %1447 = vmatpush1.bf16.msra.mxu0 %v1348
    %1448 = vmatprep.subr.bf16.mxu0 0
    %1449 = vmatpush1.bf16.msra.mxu0 %v1349
    %1450 = vmatprep.subr.bf16.mxu0 0
    %1451 = vmatpush1.bf16.msra.mxu0 %v1350
    %1452 = vmatprep.subr.bf16.mxu0 0
    %1453 = vmatpush1.bf16.msra.mxu0 %v1351
    %1454 = vmatprep.subr.bf16.mxu0 0
    %1455 = vmatpush1.bf16.msra.mxu0 %v1352
    %1456 = vmatprep.subr.bf16.mxu0 0
    %1457 = vmatpush1.bf16.msra.mxu0 %v1353
    %1458 = vmatprep.subr.bf16.mxu0 0
    %1459 = vmatpush1.bf16.msra.mxu0 %v1354
    %1460 = vmatprep.subr.bf16.mxu0 0
    %1461 = vmatpush1.bf16.msra.mxu0 %v1355
    %1462 = vmatprep.subr.bf16.mxu0 0
    %1463 = vmatpush1.bf16.msra.mxu0 %v1356
    %1464 = vmatprep.subr.bf16.mxu0 0
    %1465 = vmatpush1.bf16.msra.mxu0 %v1357
    %1466 = vmatprep.subr.bf16.mxu0 0
    %1467 = vmatpush1.bf16.msra.mxu0 %v1358
    %1468 = vmatprep.subr.bf16.mxu0 0
    %1469 = vmatpush1.bf16.msra.mxu0 %v1359
    %1470 = vmatprep.subr.bf16.mxu0 0
    %1471 = vmatpush1.bf16.msra.mxu0 %v1360
    %1472 = vmatprep.subr.bf16.mxu0 0
    %1473 = vmatpush1.bf16.msra.mxu0 %v1361
    %1474 = vmatprep.mubr.bf16.mxu0 %v1052
    %1475 = vmatmul.mubr.bf16.gmra.mrb[0].mxu0 %v1051
    %v1476 = vpop.f32.mrb[0].mxu0
    %v1477 = vadd.f32 %v1153, %v1476
    %v1478 = vpop.f32.mrb[0].mxu0
    %v1479 = vpop.f32.mrb[0].mxu0
    %v1480 = vpop.f32.mrb[0].mxu0
    %1481 = vdwg.mxu0
    %1482 = vmatprep.subr.bf16.mxu0 0
    %1483 = vmatpush1.bf16.msra.mxu0 %v1362
    %1484 = vmatprep.subr.bf16.mxu0 0
    %1485 = vmatpush1.bf16.msra.mxu0 %v1363
    %1486 = vmatprep.subr.bf16.mxu0 0
    %1487 = vmatpush1.bf16.msra.mxu0 %v1364
    %1488 = vmatprep.subr.bf16.mxu0 0
    %1489 = vmatpush1.bf16.msra.mxu0 %v1365
    %1490 = vmatprep.subr.bf16.mxu0 0
    %1491 = vmatpush1.bf16.msra.mxu0 %v1366
    %1492 = vmatprep.subr.bf16.mxu0 0
    %1493 = vmatpush1.bf16.msra.mxu0 %v1367
    %1494 = vmatprep.subr.bf16.mxu0 0
    %1495 = vmatpush1.bf16.msra.mxu0 %v1368
    %1496 = vmatprep.subr.bf16.mxu0 0
    %1497 = vmatpush1.bf16.msra.mxu0 %v1369
    %1498 = vmatprep.subr.bf16.mxu0 0
    %1499 = vmatpush1.bf16.msra.mxu0 %v1370
    %1500 = vmatprep.subr.bf16.mxu0 0
    %1501 = vmatpush1.bf16.msra.mxu0 %v1371
    %1502 = vmatprep.subr.bf16.mxu0 0
    %1503 = vmatpush1.bf16.msra.mxu0 %v1372
    %1504 = vmatprep.subr.bf16.mxu0 0
    %1505 = vmatpush1.bf16.msra.mxu0 %v1373
    %1506 = vmatprep.subr.bf16.mxu0 0
    %1507 = vmatpush1.bf16.msra.mxu0 %v1374
    %1508 = vmatprep.subr.bf16.mxu0 0
    %1509 = vmatpush1.bf16.msra.mxu0 %v1375
    %1510 = vmatprep.subr.bf16.mxu0 0
    %1511 = vmatpush1.bf16.msra.mxu0 %v1376
    %1512 = vmatprep.subr.bf16.mxu0 0
    %1513 = vmatpush1.bf16.msra.mxu0 %v1377
    %1514 = vmatprep.mubr.bf16.mxu0 %v1054
    %1515 = vmatmul.mubr.bf16.gmra.mrb[0].mxu0 %v1053
    %v1516 = vpop.f32.mrb[0].mxu0
    %v1517 = vadd.f32 %v1477, %v1516
    %v1518 = vpop.f32.mrb[0].mxu0
    %v1519 = vpop.f32.mrb[0].mxu0
    %v1520 = vpop.f32.mrb[0].mxu0
    %1521 = vdwg.mxu0
    %1522 = vmatprep.subr.bf16.mxu0 0
    %1523 = vmatpush1.bf16.msra.mxu0 %v1378
    %1524 = vmatprep.subr.bf16.mxu0 0
    %1525 = vmatpush1.bf16.msra.mxu0 %v1379
    %1526 = vmatprep.subr.bf16.mxu0 0
    %1527 = vmatpush1.bf16.msra.mxu0 %v1380
    %1528 = vmatprep.subr.bf16.mxu0 0
    %1529 = vmatpush1.bf16.msra.mxu0 %v1381
    %1530 = vmatprep.subr.bf16.mxu0 0
    %1531 = vmatpush1.bf16.msra.mxu0 %v1382
    %1532 = vmatprep.subr.bf16.mxu0 0
    %1533 = vmatpush1.bf16.msra.mxu0 %v1383
    %1534 = vmatprep.subr.bf16.mxu0 0
    %1535 = vmatpush1.bf16.msra.mxu0 %v1384
    %1536 = vmatprep.subr.bf16.mxu0 0
    %1537 = vmatpush1.bf16.msra.mxu0 %v1385
    %1538 = vmatprep.subr.bf16.mxu0 0
    %1539 = vmatpush1.bf16.msra.mxu0 %v1386
    %1540 = vmatprep.subr.bf16.mxu0 0
    %1541 = vmatpush1.bf16.msra.mxu0 %v1387
    %1542 = vmatprep.subr.bf16.mxu0 0
    %1543 = vmatpush1.bf16.msra.mxu0 %v1388
    %1544 = vmatprep.subr.bf16.mxu0 0
    %1545 = vmatpush1.bf16.msra.mxu0 %v1389
    %1546 = vmatprep.subr.bf16.mxu0 0
    %1547 = vmatpush1.bf16.msra.mxu0 %v1390
    %1548 = vmatprep.subr.bf16.mxu0 0
    %1549 = vmatpush1.bf16.msra.mxu0 %v1391
    %1550 = vmatprep.subr.bf16.mxu0 0
    %1551 = vmatpush1.bf16.msra.mxu0 %v1392
    %1552 = vmatprep.subr.bf16.mxu0 0
    %1553 = vmatpush1.bf16.msra.mxu0 %v1393
    %1554 = vmatprep.mubr.bf16.mxu0 %v1056
    %1555 = vmatmul.mubr.bf16.gmra.mrb[0].mxu0 %v1055
    %v1556 = vpop.f32.mrb[0].mxu0
    %v1557 = vadd.f32 %v1517, %v1556
    %v1558 = vpop.f32.mrb[0].mxu0
    %v1559 = vpop.f32.mrb[0].mxu0
    %v1560 = vpop.f32.mrb[0].mxu0
    %1561 = vdwg.mxu0
    %v1562 = vmax.f32 %v1557, 0.0
    %s1563 = scalar_lea.vmem %s6, 2
    %v1564 = vld [vmem:[%s1563] ss:$8 sm:$0x3]
    %v1566 = vlaneseq
    %v1567 = vshrl.u32 %v1566, 7
    %v1568 = vsub.s32 0, %v1567
    %v1569 = vrot.slane %v1564, %v1568
    %v1570 = vlaneseq
    %v1571 = vshrl.u32 %v1570, 7
    %v1572 = vsub.s32 1, %v1571
    %v1573 = vrot.slane %v1564, %v1572
    %v1576 = vmul.f32 %v1015, %v1569
    %v1577 = vmul.f32 %v1562, %v1573
    %s1578 = scalar_lea.vmem %s6, 3
    %v1579 = vld [vmem:[%s1578] ss:$8 sm:$0x3]
    %v1581 = vlaneseq
    %v1582 = vshrl.u32 %v1581, 7
    %v1583 = vsub.s32 0, %v1582
    %v1584 = vrot.slane %v1579, %v1583
    %v1585 = vlaneseq
    %v1586 = vshrl.u32 %v1585, 7
    %v1587 = vsub.s32 1, %v1586
    %v1588 = vrot.slane %v1579, %v1587
    %v1591 = vadd.f32 %v1576, %v1584
    %v1592 = vadd.f32 %v1577, %v1588
    %v1593 = vpack.c.bf16 %v1591, %v1591
    %v1594 = vpack.c.bf16 %v1592, %v1592
    %v1595 = vld [vmem:[#allocation10] sm:$0xff]
    %v1596 = vld [vmem:[#allocation10 + $0x8] sm:$0xff]
    %v1597 = vld [vmem:[#allocation10 + $0x10] sm:$0xff]
    %v1598 = vld [vmem:[#allocation10 + $0x18] sm:$0xff]
    %v1599 = vld [vmem:[#allocation10 + $0x20] sm:$0xff]
    %v1600 = vld [vmem:[#allocation10 + $0x28] sm:$0xff]
    %v1601 = vld [vmem:[#allocation10 + $0x30] sm:$0xff]
    %v1602 = vld [vmem:[#allocation10 + $0x38] sm:$0xff]
    %v1603 = vld [vmem:[#allocation10 + $0x40] sm:$0xff]
    %v1604 = vld [vmem:[#allocation10 + $0x48] sm:$0xff]
    %v1605 = vld [vmem:[#allocation10 + $0x50] sm:$0xff]
    %v1606 = vld [vmem:[#allocation10 + $0x58] sm:$0xff]
    %v1607 = vld [vmem:[#allocation10 + $0x60] sm:$0xff]
    %v1608 = vld [vmem:[#allocation10 + $0x68] sm:$0xff]
    %v1609 = vld [vmem:[#allocation10 + $0x70] sm:$0xff]
    %v1610 = vld [vmem:[#allocation10 + $0x78] sm:$0xff]
    %v1611 = vld [vmem:[#allocation10 + $0x80] sm:$0xff]
    %v1612 = vld [vmem:[#allocation10 + $0x88] sm:$0xff]
    %v1613 = vld [vmem:[#allocation10 + $0x90] sm:$0xff]
    %v1614 = vld [vmem:[#allocation10 + $0x98] sm:$0xff]
    %v1615 = vld [vmem:[#allocation10 + $0xa0] sm:$0xff]
    %v1616 = vld [vmem:[#allocation10 + $0xa8] sm:$0xff]
    %v1617 = vld [vmem:[#allocation10 + $0xb0] sm:$0xff]
    %v1618 = vld [vmem:[#allocation10 + $0xb8] sm:$0xff]
    %v1619 = vld [vmem:[#allocation10 + $0xc0] sm:$0xff]
    %v1620 = vld [vmem:[#allocation10 + $0xc8] sm:$0xff]
    %v1621 = vld [vmem:[#allocation10 + $0xd0] sm:$0xff]
    %v1622 = vld [vmem:[#allocation10 + $0xd8] sm:$0xff]
    %v1623 = vld [vmem:[#allocation10 + $0xe0] sm:$0xff]
    %v1624 = vld [vmem:[#allocation10 + $0xe8] sm:$0xff]
    %v1625 = vld [vmem:[#allocation10 + $0xf0] sm:$0xff]
    %v1626 = vld [vmem:[#allocation10 + $0xf8] sm:$0xff]
    %s1627 = scalar_lea.vmem %s6, 4
    %v1628 = vld [vmem:[%s1627] ss:$8 sm:$0x3]
    %v1630 = vlaneseq
    %v1631 = vshrl.u32 %v1630, 7
    %v1632 = vsub.s32 0, %v1631
    %v1633 = vrot.slane %v1628, %v1632
    %v1634 = vlaneseq
    %v1635 = vshrl.u32 %v1634, 7
    %v1636 = vsub.s32 1, %v1635
    %v1637 = vrot.slane %v1628, %v1636
    %v1672 = vunpack.c.l.b16 %v1595
    %v1673 = vunpack.c.h.b16 %v1595
    %v1674 = vunpack.c.l.b16 %v1596
    %v1675 = vunpack.c.h.b16 %v1596
    %v1676 = vunpack.c.l.b16 %v1597
    %v1677 = vunpack.c.h.b16 %v1597
    %v1678 = vunpack.c.l.b16 %v1598
    %v1679 = vunpack.c.h.b16 %v1598
    %v1680 = vunpack.c.l.b16 %v1599
    %v1681 = vunpack.c.h.b16 %v1599
    %v1682 = vunpack.c.l.b16 %v1600
    %v1683 = vunpack.c.h.b16 %v1600
    %v1684 = vunpack.c.l.b16 %v1601
    %v1685 = vunpack.c.h.b16 %v1601
    %v1686 = vunpack.c.l.b16 %v1602
    %v1687 = vunpack.c.h.b16 %v1602
    %v1688 = vunpack.c.l.b16 %v1603
    %v1689 = vunpack.c.h.b16 %v1603
    %v1690 = vunpack.c.l.b16 %v1604
    %v1691 = vunpack.c.h.b16 %v1604
    %v1692 = vunpack.c.l.b16 %v1605
    %v1693 = vunpack.c.h.b16 %v1605
    %v1694 = vunpack.c.l.b16 %v1606
    %v1695 = vunpack.c.h.b16 %v1606
    %v1696 = vunpack.c.l.b16 %v1607
    %v1697 = vunpack.c.h.b16 %v1607
    %v1698 = vunpack.c.l.b16 %v1608
    %v1699 = vunpack.c.h.b16 %v1608
    %v1700 = vunpack.c.l.b16 %v1609
    %v1701 = vunpack.c.h.b16 %v1609
    %v1702 = vunpack.c.l.b16 %v1610
    %v1703 = vunpack.c.h.b16 %v1610
    %v1704 = vunpack.c.l.b16 %v1611
    %v1705 = vunpack.c.h.b16 %v1611
    %v1706 = vunpack.c.l.b16 %v1612
    %v1707 = vunpack.c.h.b16 %v1612
    %v1708 = vunpack.c.l.b16 %v1613
    %v1709 = vunpack.c.h.b16 %v1613
    %v1710 = vunpack.c.l.b16 %v1614
    %v1711 = vunpack.c.h.b16 %v1614
    %v1712 = vunpack.c.l.b16 %v1615
    %v1713 = vunpack.c.h.b16 %v1615
    %v1714 = vunpack.c.l.b16 %v1616
    %v1715 = vunpack.c.h.b16 %v1616
    %v1716 = vunpack.c.l.b16 %v1617
    %v1717 = vunpack.c.h.b16 %v1617
    %v1718 = vunpack.c.l.b16 %v1618
    %v1719 = vunpack.c.h.b16 %v1618
    %v1720 = vunpack.c.l.b16 %v1619
    %v1721 = vunpack.c.h.b16 %v1619
    %v1722 = vunpack.c.l.b16 %v1620
    %v1723 = vunpack.c.h.b16 %v1620
    %v1724 = vunpack.c.l.b16 %v1621
    %v1725 = vunpack.c.h.b16 %v1621
    %v1726 = vunpack.c.l.b16 %v1622
    %v1727 = vunpack.c.h.b16 %v1622
    %v1728 = vunpack.c.l.b16 %v1623
    %v1729 = vunpack.c.h.b16 %v1623
    %v1730 = vunpack.c.l.b16 %v1624
    %v1731 = vunpack.c.h.b16 %v1624
    %v1732 = vunpack.c.l.b16 %v1625
    %v1733 = vunpack.c.h.b16 %v1625
    %v1734 = vunpack.c.l.b16 %v1626
    %v1735 = vunpack.c.h.b16 %v1626
    %v1736 = vpack.c.b16 %v1674, %v1672
    %v1737 = vpack.c.b16 %v1675, %v1673
    %v1738 = vpack.c.b16 %v1678, %v1676
    %v1739 = vpack.c.b16 %v1679, %v1677
    %v1740 = vpack.c.b16 %v1682, %v1680
    %v1741 = vpack.c.b16 %v1683, %v1681
    %v1742 = vpack.c.b16 %v1686, %v1684
    %v1743 = vpack.c.b16 %v1687, %v1685
    %v1744 = vpack.c.b16 %v1690, %v1688
    %v1745 = vpack.c.b16 %v1691, %v1689
    %v1746 = vpack.c.b16 %v1694, %v1692
    %v1747 = vpack.c.b16 %v1695, %v1693
    %v1748 = vpack.c.b16 %v1698, %v1696
    %v1749 = vpack.c.b16 %v1699, %v1697
    %v1750 = vpack.c.b16 %v1702, %v1700
    %v1751 = vpack.c.b16 %v1703, %v1701
    %v1752 = vpack.c.b16 %v1706, %v1704
    %v1753 = vpack.c.b16 %v1707, %v1705
    %v1754 = vpack.c.b16 %v1710, %v1708
    %v1755 = vpack.c.b16 %v1711, %v1709
    %v1756 = vpack.c.b16 %v1714, %v1712
    %v1757 = vpack.c.b16 %v1715, %v1713
    %v1758 = vpack.c.b16 %v1718, %v1716
    %v1759 = vpack.c.b16 %v1719, %v1717
    %v1760 = vpack.c.b16 %v1722, %v1720
    %v1761 = vpack.c.b16 %v1723, %v1721
    %v1762 = vpack.c.b16 %v1726, %v1724
    %v1763 = vpack.c.b16 %v1727, %v1725
    %v1764 = vpack.c.b16 %v1730, %v1728
    %v1765 = vpack.c.b16 %v1731, %v1729
    %v1766 = vpack.c.b16 %v1734, %v1732
    %v1767 = vpack.c.b16 %v1735, %v1733
    %1800 = vmatprep.subr.bf16.mxu0 %v1737
    %1801 = vmatpush1.bf16.msra.mxu0 %v1736
    %1802 = vmatprep.subr.bf16.mxu0 %v1739
    %1803 = vmatpush1.bf16.msra.mxu0 %v1738
    %1804 = vmatprep.subr.bf16.mxu0 %v1741
    %1805 = vmatpush1.bf16.msra.mxu0 %v1740
    %1806 = vmatprep.subr.bf16.mxu0 %v1743
    %1807 = vmatpush1.bf16.msra.mxu0 %v1742
    %1808 = vmatprep.subr.bf16.mxu0 %v1745
    %1809 = vmatpush1.bf16.msra.mxu0 %v1744
    %1810 = vmatprep.subr.bf16.mxu0 %v1747
    %1811 = vmatpush1.bf16.msra.mxu0 %v1746
    %1812 = vmatprep.subr.bf16.mxu0 %v1749
    %1813 = vmatpush1.bf16.msra.mxu0 %v1748
    %1814 = vmatprep.subr.bf16.mxu0 %v1751
    %1815 = vmatpush1.bf16.msra.mxu0 %v1750
    %1816 = vmatprep.subr.bf16.mxu0 %v1753
    %1817 = vmatpush1.bf16.msra.mxu0 %v1752
    %1818 = vmatprep.subr.bf16.mxu0 %v1755
    %1819 = vmatpush1.bf16.msra.mxu0 %v1754
    %1820 = vmatprep.subr.bf16.mxu0 %v1757
    %1821 = vmatpush1.bf16.msra.mxu0 %v1756
    %1822 = vmatprep.subr.bf16.mxu0 %v1759
    %1823 = vmatpush1.bf16.msra.mxu0 %v1758
    %1824 = vmatprep.subr.bf16.mxu0 %v1761
    %1825 = vmatpush1.bf16.msra.mxu0 %v1760
    %1826 = vmatprep.subr.bf16.mxu0 %v1763
    %1827 = vmatpush1.bf16.msra.mxu0 %v1762
    %1828 = vmatprep.subr.bf16.mxu0 %v1765
    %1829 = vmatpush1.bf16.msra.mxu0 %v1764
    %1830 = vmatprep.subr.bf16.mxu0 %v1767
    %1831 = vmatpush1.bf16.msra.mxu0 %v1766
    %1832 = vmatprep.mubr.bf16.mxu0 %v1594
    %1833 = vmatmul.mubr.bf16.gmra.mrb[0].mxu0 %v1593
    %v1834 = vpop.f32.mrb[0].mxu0
    %v1835 = vadd.f32 %v1633, %v1834
    %v1836 = vpop.f32.mrb[0].mxu0
    %v1837 = vadd.f32 %v1637, %v1836
    %v1838 = vpop.f32.mrb[0].mxu0
    %v1839 = vpop.f32.mrb[0].mxu0
    %1840 = vdwg.mxu0
    %v1841 = vmax.f32 %v1835, 0.0
    %v1842 = vmax.f32 %v1837, 0.0
    %v1843 = vpack.c.bf16 %v1841, %v1841
    %v1844 = vpack.c.bf16 %v1842, %v1842
    %v1845 = vld [vmem:[#allocation11] sm:$0xf]
    %v1846 = vld [vmem:[#allocation11 + $0x4] sm:$0xf]
    %v1847 = vld [vmem:[#allocation11 + $0x8] sm:$0xf]
    %v1848 = vld [vmem:[#allocation11 + $0xc] sm:$0xf]
    %v1849 = vld [vmem:[#allocation11 + $0x10] sm:$0xf]
    %v1850 = vld [vmem:[#allocation11 + $0x14] sm:$0xf]
    %v1851 = vld [vmem:[#allocation11 + $0x18] sm:$0xf]
    %v1852 = vld [vmem:[#allocation11 + $0x1c] sm:$0xf]
    %v1853 = vld [vmem:[#allocation11 + $0x20] sm:$0xf]
    %v1854 = vld [vmem:[#allocation11 + $0x24] sm:$0xf]
    %v1855 = vld [vmem:[#allocation11 + $0x28] sm:$0xf]
    %v1856 = vld [vmem:[#allocation11 + $0x2c] sm:$0xf]
    %v1857 = vld [vmem:[#allocation11 + $0x30] sm:$0xf]
    %v1858 = vld [vmem:[#allocation11 + $0x34] sm:$0xf]
    %v1859 = vld [vmem:[#allocation11 + $0x38] sm:$0xf]
    %v1860 = vld [vmem:[#allocation11 + $0x3c] sm:$0xf]
    %v1861 = vld [vmem:[#allocation11 + $0x40] sm:$0xf]
    %v1862 = vld [vmem:[#allocation11 + $0x44] sm:$0xf]
    %v1863 = vld [vmem:[#allocation11 + $0x48] sm:$0xf]
    %v1864 = vld [vmem:[#allocation11 + $0x4c] sm:$0xf]
    %v1865 = vld [vmem:[#allocation11 + $0x50] sm:$0xf]
    %v1866 = vld [vmem:[#allocation11 + $0x54] sm:$0xf]
    %v1867 = vld [vmem:[#allocation11 + $0x58] sm:$0xf]
    %v1868 = vld [vmem:[#allocation11 + $0x5c] sm:$0xf]
    %v1869 = vld [vmem:[#allocation11 + $0x60] sm:$0xf]
    %v1870 = vld [vmem:[#allocation11 + $0x64] sm:$0xf]
    %v1871 = vld [vmem:[#allocation11 + $0x68] sm:$0xf]
    %v1872 = vld [vmem:[#allocation11 + $0x6c] sm:$0xf]
    %v1873 = vld [vmem:[#allocation11 + $0x70] sm:$0xf]
    %v1874 = vld [vmem:[#allocation11 + $0x74] sm:$0xf]
    %v1875 = vld [vmem:[#allocation11 + $0x78] sm:$0xf]
    %v1876 = vld [vmem:[#allocation11 + $0x7c] sm:$0xf]
    %v1877 = vld [vmem:[%s6 + $0x5] ss:$0 sm:$0xff]
    %v1910 = vunpack.c.l.b16 %v1845
    %v1911 = vunpack.c.l.b16 %v1846
    %v1912 = vunpack.c.l.b16 %v1847
    %v1913 = vunpack.c.l.b16 %v1848
    %v1914 = vunpack.c.l.b16 %v1849
    %v1915 = vunpack.c.l.b16 %v1850
    %v1916 = vunpack.c.l.b16 %v1851
    %v1917 = vunpack.c.l.b16 %v1852
    %v1918 = vunpack.c.l.b16 %v1853
    %v1919 = vunpack.c.l.b16 %v1854
    %v1920 = vunpack.c.l.b16 %v1855
    %v1921 = vunpack.c.l.b16 %v1856
    %v1922 = vunpack.c.l.b16 %v1857
    %v1923 = vunpack.c.l.b16 %v1858
    %v1924 = vunpack.c.l.b16 %v1859
    %v1925 = vunpack.c.l.b16 %v1860
    %v1926 = vunpack.c.l.b16 %v1861
    %v1927 = vunpack.c.l.b16 %v1862
    %v1928 = vunpack.c.l.b16 %v1863
    %v1929 = vunpack.c.l.b16 %v1864
    %v1930 = vunpack.c.l.b16 %v1865
    %v1931 = vunpack.c.l.b16 %v1866
    %v1932 = vunpack.c.l.b16 %v1867
    %v1933 = vunpack.c.l.b16 %v1868
    %v1934 = vunpack.c.l.b16 %v1869
    %v1935 = vunpack.c.l.b16 %v1870
    %v1936 = vunpack.c.l.b16 %v1871
    %v1937 = vunpack.c.l.b16 %v1872
    %v1938 = vunpack.c.l.b16 %v1873
    %v1939 = vunpack.c.l.b16 %v1874
    %v1940 = vunpack.c.l.b16 %v1875
    %v1941 = vunpack.c.l.b16 %v1876
    %v1942 = vpack.c.b16 %v1911, %v1910
    %v1943 = vpack.c.b16 %v1913, %v1912
    %v1944 = vpack.c.b16 %v1915, %v1914
    %v1945 = vpack.c.b16 %v1917, %v1916
    %v1946 = vpack.c.b16 %v1919, %v1918
    %v1947 = vpack.c.b16 %v1921, %v1920
    %v1948 = vpack.c.b16 %v1923, %v1922
    %v1949 = vpack.c.b16 %v1925, %v1924
    %v1950 = vpack.c.b16 %v1927, %v1926
    %v1951 = vpack.c.b16 %v1929, %v1928
    %v1952 = vpack.c.b16 %v1931, %v1930
    %v1953 = vpack.c.b16 %v1933, %v1932
    %v1954 = vpack.c.b16 %v1935, %v1934
    %v1955 = vpack.c.b16 %v1937, %v1936
    %v1956 = vpack.c.b16 %v1939, %v1938
    %v1957 = vpack.c.b16 %v1941, %v1940
    %1974 = vmatprep.subr.bf16.mxu0 0
    %1975 = vmatpush1.bf16.msra.mxu0 %v1942
    %1976 = vmatprep.subr.bf16.mxu0 0
    %1977 = vmatpush1.bf16.msra.mxu0 %v1943
    %1978 = vmatprep.subr.bf16.mxu0 0
    %1979 = vmatpush1.bf16.msra.mxu0 %v1944
    %1980 = vmatprep.subr.bf16.mxu0 0
    %1981 = vmatpush1.bf16.msra.mxu0 %v1945
    %1982 = vmatprep.subr.bf16.mxu0 0
    %1983 = vmatpush1.bf16.msra.mxu0 %v1946
    %1984 = vmatprep.subr.bf16.mxu0 0
    %1985 = vmatpush1.bf16.msra.mxu0 %v1947
    %1986 = vmatprep.subr.bf16.mxu0 0
    %1987 = vmatpush1.bf16.msra.mxu0 %v1948
    %1988 = vmatprep.subr.bf16.mxu0 0
    %1989 = vmatpush1.bf16.msra.mxu0 %v1949
    %1990 = vmatprep.subr.bf16.mxu0 0
    %1991 = vmatpush1.bf16.msra.mxu0 %v1950
    %1992 = vmatprep.subr.bf16.mxu0 0
    %1993 = vmatpush1.bf16.msra.mxu0 %v1951
    %1994 = vmatprep.subr.bf16.mxu0 0
    %1995 = vmatpush1.bf16.msra.mxu0 %v1952
    %1996 = vmatprep.subr.bf16.mxu0 0
    %1997 = vmatpush1.bf16.msra.mxu0 %v1953
    %1998 = vmatprep.subr.bf16.mxu0 0
    %1999 = vmatpush1.bf16.msra.mxu0 %v1954
    %2000 = vmatprep.subr.bf16.mxu0 0
    %2001 = vmatpush1.bf16.msra.mxu0 %v1955
    %2002 = vmatprep.subr.bf16.mxu0 0
    %2003 = vmatpush1.bf16.msra.mxu0 %v1956
    %2004 = vmatprep.subr.bf16.mxu0 0
    %2005 = vmatpush1.bf16.msra.mxu0 %v1957
    %2006 = vmatprep.mubr.bf16.mxu0 %v1844
    %2007 = vmatmul.mubr.bf16.gmra.mrb[0].mxu0 %v1843
    %v2008 = vpop.f32.mrb[0].mxu0
    %v2009 = vadd.f32 %v1877, %v2008
    %v2010 = vpop.f32.mrb[0].mxu0
    %v2011 = vpop.f32.mrb[0].mxu0
    %v2012 = vpop.f32.mrb[0].mxu0
    %2013 = vdwg.mxu0
    %2014 = vst [vmem:[#allocation13] sm:$0x3] %v2009
    // Predicated region
    $region54: #{tpu_custom_call.1} parent=1 // pred_check
      _
    $region55: #{tpu_custom_call.1} parent=1 // pred_check_branch
      %2016 = sbr.rel (0) target = $region57
    $region56: #{tpu_custom_call.1} parent=1 // pred_region
      %s2018 = ssub.s32 32, 32
      %2019 = vsyncadd [#allocation4], %s2018
      %s2021 = sshll.u32 [#allocation13], 4
      %s2022 = int_to_ptr.vmem [resolvable:$true] %s2021
      %2024 = dma.vmem_to_hbm [thread:$0]  %s2022, 32, %s7, [#allocation4]
    $region57: #{tpu_custom_call.1} parent=1 // pred_fallthru
      _
    // Predicated region
    $region58: #{tpu_custom_call.1} parent=1 // pred_check
      _
    $region59: #{tpu_custom_call.1} parent=1 // pred_check_branch
      %2026 = sbr.rel (0) target = $region61
    $region60: #{tpu_custom_call.1} parent=1 // pred_region
      %2027 = dma.done [#allocation4], 32
    $region61: #{tpu_custom_call.1} parent=1 // pred_fallthru
      _
    %2028 = vsyncpa [#allocation3], 1
    %2029 = vsyncpa [#allocation6], 1
    %2030 = vsyncpa [#allocation9], 1
    %2031 = vsyncpa [#allocation12], 1
    %2032 = vsyncpa [#allocation4], 1

</llo_original>
